<compile_context>
chip_gen: v6e
topology: v6e:2x2x1
jax: 0.10.0
libtpu: 0.0.40
codegen_flags: <defaults>
</compile_context>

<pallas_src>
import functools

import jax
import jax.numpy as jnp
from jax import lax
from jax.experimental import pallas as pl
from jax.experimental.pallas import tpu as pltpu


def _conv_bn_swish_kernel(x_ref, w_ref, scale_ref, shift_ref, hbeta_ref, o_ref,
                          lhs_ref, ybuf_ref, *, KH, KW, TH, W, Cin, Cout):
    """One (batch, row-band) tile per grid step.

    x_ref    : (1, H+KH-1, W+KW-1, Cin)  whole padded NHWC image (bf16), VMEM-resident
    w_ref    : (KH*KW*Cin, Cout)         im2col weights (bf16), K ordered (kh, kw, ci)
    scale_ref: (1, Cout)                 fused BN scale  (gamma / sqrt(var + eps))
    shift_ref: (1, Cout)                 fused BN shift  ((conv_b - mean)*scale + bn_beta)
    hbeta_ref: (1, Cout)                 0.5 * swish beta (broadcast per channel)
    o_ref    : (1, TH, W*Cout)           output row band, lane-dense minor dim
    lhs_ref  : (TH*W, KH*KW*Cin) VMEM    im2col LHS scratch (bf16)
    ybuf_ref : (TH, W, Cout)     VMEM    output relayout staging buffer
    """
    r = pl.program_id(1)
    row0 = pl.multiple_of(r * TH, TH)

    # ---- im2col straight from the ref: 9 short-lived tap loads -> LHS scratch ----
    for kh in range(KH):
        for kw in range(KW):
            tap = x_ref[0, pl.ds(row0 + kh, TH), pl.ds(kw, W), :]   # (TH, W, Cin)
            k0 = (kh * KW + kw) * Cin
            lhs_ref[:, k0:k0 + Cin] = tap.reshape(TH * W, Cin)

    # ---- single fused-K MXU matmul: (TH*W, 9*Cin) x (9*Cin, Cout), f32 accumulate ----
    y = jnp.dot(lhs_ref[...], w_ref[...], preferred_element_type=jnp.float32)

    # ---- conv bias + eval-mode BatchNorm folded into one per-channel affine (f32) ----
    y = y * scale_ref[...] + shift_ref[...]

    # ---- trainable swish: y * sigmoid(beta*y); sigmoid(z) = 0.5*tanh(z/2) + 0.5 ----
    y = y * (0.5 * jnp.tanh(y * hbeta_ref[...]) + 0.5)

    # ---- lane-dense store (minor dim = W*Cout) without channel padding ----
    # (TH*W, Cout) -> (TH, W*Cout) relayout through a VMEM staging buffer using plain
    # ref loads/stores.  TODO(synk): when Cout % 128 == 0 the result can be stored
    # directly with a channel-tiled output BlockSpec instead of the per-column loop.
    ybuf_ref[...] = y.reshape(TH, W, Cout).astype(o_ref.dtype)
    for w in range(W):
        o_ref[0, :, w * Cout:(w + 1) * Cout] = ybuf_ref[:, w, :]


def _vmem_capacity_bytes(default_bytes=64 << 20):
    """Physical per-core VMEM (128 MiB on v5e/v6e, 64 MiB on v7x); safe fallback."""
    try:
        return int(pltpu.get_tpu_info().vmem_capacity_bytes)
    except Exception:
        return default_bytes


def _pick_row_tile(H, W, Cin, Cout, KH, KW, budget_bytes, out_itemsize=4):
    """Largest legal row tile whose VMEM working set fits `budget_bytes`."""
    Hp, Wp = H + KH - 1, W + KW - 1
    K = KH * KW * Cin
    fixed = (2 * Hp * Wp * Cin * 2        # double-buffered padded image (bf16)
             + 2 * K * Cout * 2           # double-buffered weights (bf16)
             + 2 * 3 * Cout * 4)          # scale / shift / half-beta
    candidates = [t for t in range(1, H + 1)
                  if H % t == 0 and (t % 8 == 0 or t == H)]
    best = None
    for th in candidates:                 # ascending; keep the largest that fits
        per_band = th * W * (K * 2                      # im2col LHS scratch (bf16)
                             + 3 * Cout * 4             # f32 result / affine temps
                             + Cout * 4                 # relayout staging buffer
                             + 2 * Cout * out_itemsize)  # double-buffered output band
        if fixed + per_band <= budget_bytes:
            best = th
    return best if best is not None else candidates[0]


def conv2d_norm_act(x_nchw, params, eps=1e-5, row_tile=None,
                    compute_dtype=jnp.bfloat16):
    """Forward pass of Conv2dNornAct.  Input/output are NCHW float32."""
    w = params["conv_w"]            # (Cout, Cin, KH, KW)  (PyTorch layout)
    b = params["conv_b"]            # (Cout,)
    gamma = params["bn_gamma"]      # (Cout,)
    beta_bn = params["bn_beta"]     # (Cout,)
    mean = params["bn_mean"]        # (Cout,)
    var = params["bn_var"]          # (Cout,)
    swish_beta = params["swish_beta"]

    N, Cin, H, W = x_nchw.shape
    Cout, _, KH, KW = w.shape
    assert KH % 2 == 1 and KW % 2 == 1, "'same' padding path assumes odd kernel"
    ph, pw = KH // 2, KW // 2
    Hp, Wp = H + 2 * ph, W + 2 * pw
    K = KH * KW * Cin
    out_dtype = x_nchw.dtype
    out_itemsize = jnp.dtype(out_dtype).itemsize

    vmem_cap = _vmem_capacity_bytes()
    if row_tile is None:
        row_tile = _pick_row_tile(H, W, Cin, Cout, KH, KW,
                                  budget_bytes=vmem_cap // 2,
                                  out_itemsize=out_itemsize)
    assert H % row_tile == 0, (H, row_tile)
    assert row_tile % 8 == 0 or row_tile == H, row_tile
    num_row_tiles = H // row_tile

    # ---- glue (plain JAX): NCHW -> NHWC, zero-pad spatially, cast to bf16 ----
    x = jnp.transpose(x_nchw, (0, 2, 3, 1)).astype(compute_dtype)     # (N, H, W, Cin)
    xp = jnp.pad(x, ((0, 0), (ph, ph), (pw, pw), (0, 0)))             # (N, Hp, Wp, Cin)

    # Conv weights -> (KH*KW*Cin, Cout): contraction index ordered (kh, kw, ci).
    w_t = jnp.transpose(w, (2, 3, 1, 0)).reshape(K, Cout).astype(compute_dtype)

    # Fuse conv bias + eval-mode BatchNorm into per-channel scale/shift (f32).
    inv_std = (gamma / jnp.sqrt(var + eps)).astype(jnp.float32)
    scale = inv_std.reshape(1, Cout)
    shift = ((b - mean) * inv_std + beta_bn).astype(jnp.float32).reshape(1, Cout)
    half_beta = jnp.full((1, Cout), 0.5, jnp.float32) * jnp.asarray(swish_beta,
                                                                    jnp.float32)

    kernel = functools.partial(_conv_bn_swish_kernel,
                               KH=KH, KW=KW, TH=row_tile, W=W, Cin=Cin, Cout=Cout)

    flops = 2 * N * H * W * K * Cout
    bytes_accessed = (int(xp.size) * 2 + int(w_t.size) * 2 + 3 * Cout * 4
                      + N * H * W * Cout * out_itemsize)

    # VMEM working set (pipeliner double-buffers the image, weights and output band).
    est = (2 * Hp * Wp * Cin * 2 + 2 * K * Cout * 2 + 2 * 3 * Cout * 4
           + row_tile * W * (K * 2 + 4 * Cout * 4 + 2 * Cout * out_itemsize))
    vmem_limit = int(min(max(2 * est, 32 << 20), (vmem_cap * 7) // 8))

    out = pl.pallas_call(
        kernel,
        out_shape=jax.ShapeDtypeStruct((N, H, W * Cout), out_dtype),
        grid=(N, num_row_tiles),
        in_specs=[
            # Whole padded image of batch n; block index depends only on n, so it is
            # DMA'd once per n and stays VMEM-resident across its row tiles.
            pl.BlockSpec((1, Hp, Wp, Cin), lambda n, r: (n, 0, 0, 0)),
            pl.BlockSpec((K, Cout), lambda n, r: (0, 0)),
            pl.BlockSpec((1, Cout), lambda n, r: (0, 0)),
            pl.BlockSpec((1, Cout), lambda n, r: (0, 0)),
            pl.BlockSpec((1, Cout), lambda n, r: (0, 0)),
        ],
        out_specs=pl.BlockSpec((1, row_tile, W * Cout), lambda n, r: (n, r, 0)),
        scratch_shapes=[
            pltpu.VMEM((row_tile * W, K), compute_dtype),   # im2col LHS
            pltpu.VMEM((row_tile, W, Cout), out_dtype),     # output relayout staging
        ],
        compiler_params=pltpu.CompilerParams(
            dimension_semantics=("parallel", "parallel"),
            vmem_limit_bytes=vmem_limit),
        cost_estimate=pl.CostEstimate(
            flops=flops,
            transcendentals=N * H * W * Cout,
            bytes_accessed=int(bytes_accessed)),
    )(xp, w_t, scale, shift, half_beta)

    out = out.reshape(N, H, W, Cout)
    return jnp.transpose(out, (0, 3, 1, 2))                 # back to NCHW


def _reference(x_nchw, params, eps=1e-5, conv_dtype=jnp.bfloat16):
    """Pure-JAX reference matching the PyTorch module (eval-mode BN).

    Conv operands are cast to the same bf16 dtype the kernel feeds the MXU so the
    comparison isolates kernel correctness from bf16 input rounding.
    """
    w, b = params["conv_w"], params["conv_b"]
    gamma, beta_bn = params["bn_gamma"], params["bn_beta"]
    mean, var = params["bn_mean"], params["bn_var"]
    sb = params["swish_beta"]
    y = lax.conv_general_dilated(
        x_nchw.astype(conv_dtype), w.astype(conv_dtype),
        window_strides=(1, 1), padding="SAME",
        dimension_numbers=("NCHW", "OIHW", "NCHW"),
        preferred_element_type=jnp.float32)
    y = y + b[None, :, None, None]
    y = (y - mean[None, :, None, None]) * (gamma / jnp.sqrt(var + eps))[None, :, None, None] \
        + beta_bn[None, :, None, None]
    return y * jax.nn.sigmoid(sb * y)


if __name__ == "__main__":
    N, Cin, Cout, H, W = 2, 4, 8, 16, 16
    KH, KW = 3, 3

    key = jax.random.PRNGKey(0)
    kx, kw, kb, kg, kbb, km, kv = jax.random.split(key, 7)

    x = jax.random.normal(kx, (N, Cin, H, W), dtype=jnp.float32)

    params = {
        "conv_w": 0.1 * jax.random.normal(kw, (Cout, Cin, KH, KW), jnp.float32),
        "conv_b": 0.1 * jax.random.normal(kb, (Cout,), jnp.float32),
        "bn_gamma": jax.random.uniform(kg, (Cout,), jnp.float32, 0.5, 1.5),
        "bn_beta": 0.1 * jax.random.normal(kbb, (Cout,), jnp.float32),
        "bn_mean": 0.1 * jax.random.normal(km, (Cout,), jnp.float32),
        "bn_var": jax.random.uniform(kv, (Cout,), jnp.float32, 0.5, 1.5),
        "swish_beta": jnp.float32(1.0),   # TrainableSwish init beta = 1.0
    }

    # row_tile=8 -> grid (N, H/8) = (2, 2): exercises the 2-D spatially-tiled grid.
    out = conv2d_norm_act(x, params, row_tile=8)
    out = jax.block_until_ready(out)

    ref = _reference(x, params)
    assert out.shape == (N, Cout, H, W), out.shape
    max_err = float(jnp.max(jnp.abs(out - ref)))
    # Exact tanh-based sigmoid (no approx reciprocal) -> tight tolerance; remaining
    # difference is only bf16 MXU accumulation-order noise.
    assert jnp.allclose(out, ref, atol=2e-3, rtol=2e-3), max_err

    print("KERNEL_OK")
</pallas_src>

<mosaic_0001>
module attributes {stable_mosaic.version = 11 : i64} {
  func.func @_conv_bn_swish_kernel(%arg0: i32, %arg1: i32, %arg2: memref<1x18x18x4xbf16, #tpu.memory_space<vmem>>, %arg3: memref<36x8xbf16, #tpu.memory_space<vmem>>, %arg4: memref<1x8xf32, #tpu.memory_space<vmem>>, %arg5: memref<1x8xf32, #tpu.memory_space<vmem>>, %arg6: memref<1x8xf32, #tpu.memory_space<vmem>>, %arg7: memref<1x8x128xf32, #tpu.memory_space<vmem>>, %arg8: memref<128x36xbf16, #tpu.memory_space<vmem>>, %arg9: memref<8x16x8xf32, #tpu.memory_space<vmem>>) attributes {dimension_semantics = [#tpu.dimension_semantics<parallel>, #tpu.dimension_semantics<parallel>], iteration_bounds = array<i64: 2, 2>, scalar_prefetch = 0 : i64, scratch_operands = 2 : i64, tpu.core_type = #tpu.core_type<tc>, window_params = [{transform_indices = @transform_0, window_bounds = array<i64: 1, 18, 18, 4>}, {pipeline_mode = #tpu.pipeline_mode<synchronous>, transform_indices = @transform_1, window_bounds = array<i64: 36, 8>}, {pipeline_mode = #tpu.pipeline_mode<synchronous>, transform_indices = @transform_2, window_bounds = array<i64: 1, 8>}, {pipeline_mode = #tpu.pipeline_mode<synchronous>, transform_indices = @transform_3, window_bounds = array<i64: 1, 8>}, {pipeline_mode = #tpu.pipeline_mode<synchronous>, transform_indices = @transform_4, window_bounds = array<i64: 1, 8>}, {transform_indices = @transform_5, window_bounds = array<i64: 1, 8, 128>}]} {
    %c8_i32 = arith.constant 8 : i32
    %0 = arith.muli %arg1, %c8_i32 : i32
    %1 = tpu.assume_multiple %0, 8 : i32
    %c0_i32 = arith.constant 0 : i32
    %2 = arith.addi %1, %c0_i32 : i32
    %c0 = arith.constant 0 : index
    %3 = arith.index_cast %2 : i32 to index
    %c0_0 = arith.constant 0 : index
    %c0_1 = arith.constant 0 : index
    %4 = vector.load %arg2[%c0, %3, %c0_0, %c0_1] : memref<1x18x18x4xbf16, #tpu.memory_space<vmem>>, vector<1x8x16x4xbf16>
    %5 = vector.shape_cast %4 : vector<1x8x16x4xbf16> to vector<8x16x4xbf16>
    %6 = vector.shape_cast %5 : vector<8x16x4xbf16> to vector<128x4xbf16>
    %c0_2 = arith.constant 0 : index
    %c0_3 = arith.constant 0 : index
    %7 = vector.load %arg8[%c0_2, %c0_3] : memref<128x36xbf16, #tpu.memory_space<vmem>>, vector<128x4xbf16>
    tpu.vector_store %arg8[%c0_2, %c0_3], %6 {strides = array<i32>} : memref<128x36xbf16, #tpu.memory_space<vmem>>, vector<128x4xbf16>,
    %c0_i32_4 = arith.constant 0 : i32
    %8 = arith.addi %1, %c0_i32_4 : i32
    %c0_5 = arith.constant 0 : index
    %9 = arith.index_cast %8 : i32 to index
    %c1 = arith.constant 1 : index
    %c0_6 = arith.constant 0 : index
    %10 = vector.load %arg2[%c0_5, %9, %c1, %c0_6] : memref<1x18x18x4xbf16, #tpu.memory_space<vmem>>, vector<1x8x16x4xbf16>
    %11 = vector.shape_cast %10 : vector<1x8x16x4xbf16> to vector<8x16x4xbf16>
    %12 = vector.shape_cast %11 : vector<8x16x4xbf16> to vector<128x4xbf16>
    %c0_7 = arith.constant 0 : index
    %c4 = arith.constant 4 : index
    %13 = vector.load %arg8[%c0_7, %c4] : memref<128x36xbf16, #tpu.memory_space<vmem>>, vector<128x4xbf16>
    tpu.vector_store %arg8[%c0_7, %c4], %12 {strides = array<i32>} : memref<128x36xbf16, #tpu.memory_space<vmem>>, vector<128x4xbf16>,
    %c0_i32_8 = arith.constant 0 : i32
    %14 = arith.addi %1, %c0_i32_8 : i32
    %c0_9 = arith.constant 0 : index
    %15 = arith.index_cast %14 : i32 to index
    %c2 = arith.constant 2 : index
    %c0_10 = arith.constant 0 : index
    %16 = vector.load %arg2[%c0_9, %15, %c2, %c0_10] : memref<1x18x18x4xbf16, #tpu.memory_space<vmem>>, vector<1x8x16x4xbf16>
    %17 = vector.shape_cast %16 : vector<1x8x16x4xbf16> to vector<8x16x4xbf16>
    %18 = vector.shape_cast %17 : vector<8x16x4xbf16> to vector<128x4xbf16>
    %c0_11 = arith.constant 0 : index
    %c8 = arith.constant 8 : index
    %19 = vector.load %arg8[%c0_11, %c8] : memref<128x36xbf16, #tpu.memory_space<vmem>>, vector<128x4xbf16>
    tpu.vector_store %arg8[%c0_11, %c8], %18 {strides = array<i32>} : memref<128x36xbf16, #tpu.memory_space<vmem>>, vector<128x4xbf16>,
    %c1_i32 = arith.constant 1 : i32
    %20 = arith.addi %1, %c1_i32 : i32
    %c0_12 = arith.constant 0 : index
    %21 = arith.index_cast %20 : i32 to index
    %c0_13 = arith.constant 0 : index
    %c0_14 = arith.constant 0 : index
    %22 = vector.load %arg2[%c0_12, %21, %c0_13, %c0_14] : memref<1x18x18x4xbf16, #tpu.memory_space<vmem>>, vector<1x8x16x4xbf16>
    %23 = vector.shape_cast %22 : vector<1x8x16x4xbf16> to vector<8x16x4xbf16>
    %24 = vector.shape_cast %23 : vector<8x16x4xbf16> to vector<128x4xbf16>
    %c0_15 = arith.constant 0 : index
    %c12 = arith.constant 12 : index
    %25 = vector.load %arg8[%c0_15, %c12] : memref<128x36xbf16, #tpu.memory_space<vmem>>, vector<128x4xbf16>
    tpu.vector_store %arg8[%c0_15, %c12], %24 {strides = array<i32>} : memref<128x36xbf16, #tpu.memory_space<vmem>>, vector<128x4xbf16>,
    %c1_i32_16 = arith.constant 1 : i32
    %26 = arith.addi %1, %c1_i32_16 : i32
    %c0_17 = arith.constant 0 : index
    %27 = arith.index_cast %26 : i32 to index
    %c1_18 = arith.constant 1 : index
    %c0_19 = arith.constant 0 : index
    %28 = vector.load %arg2[%c0_17, %27, %c1_18, %c0_19] : memref<1x18x18x4xbf16, #tpu.memory_space<vmem>>, vector<1x8x16x4xbf16>
    %29 = vector.shape_cast %28 : vector<1x8x16x4xbf16> to vector<8x16x4xbf16>
    %30 = vector.shape_cast %29 : vector<8x16x4xbf16> to vector<128x4xbf16>
    %c0_20 = arith.constant 0 : index
    %c16 = arith.constant 16 : index
    %31 = vector.load %arg8[%c0_20, %c16] : memref<128x36xbf16, #tpu.memory_space<vmem>>, vector<128x4xbf16>
    tpu.vector_store %arg8[%c0_20, %c16], %30 {strides = array<i32>} : memref<128x36xbf16, #tpu.memory_space<vmem>>, vector<128x4xbf16>,
    %c1_i32_21 = arith.constant 1 : i32
    %32 = arith.addi %1, %c1_i32_21 : i32
    %c0_22 = arith.constant 0 : index
    %33 = arith.index_cast %32 : i32 to index
    %c2_23 = arith.constant 2 : index
    %c0_24 = arith.constant 0 : index
    %34 = vector.load %arg2[%c0_22, %33, %c2_23, %c0_24] : memref<1x18x18x4xbf16, #tpu.memory_space<vmem>>, vector<1x8x16x4xbf16>
    %35 = vector.shape_cast %34 : vector<1x8x16x4xbf16> to vector<8x16x4xbf16>
    %36 = vector.shape_cast %35 : vector<8x16x4xbf16> to vector<128x4xbf16>
    %c0_25 = arith.constant 0 : index
    %c20 = arith.constant 20 : index
    %37 = vector.load %arg8[%c0_25, %c20] : memref<128x36xbf16, #tpu.memory_space<vmem>>, vector<128x4xbf16>
    tpu.vector_store %arg8[%c0_25, %c20], %36 {strides = array<i32>} : memref<128x36xbf16, #tpu.memory_space<vmem>>, vector<128x4xbf16>,
    %c2_i32 = arith.constant 2 : i32
    %38 = arith.addi %1, %c2_i32 : i32
    %c0_26 = arith.constant 0 : index
    %39 = arith.index_cast %38 : i32 to index
    %c0_27 = arith.constant 0 : index
    %c0_28 = arith.constant 0 : index
    %40 = vector.load %arg2[%c0_26, %39, %c0_27, %c0_28] : memref<1x18x18x4xbf16, #tpu.memory_space<vmem>>, vector<1x8x16x4xbf16>
    %41 = vector.shape_cast %40 : vector<1x8x16x4xbf16> to vector<8x16x4xbf16>
    %42 = vector.shape_cast %41 : vector<8x16x4xbf16> to vector<128x4xbf16>
    %c0_29 = arith.constant 0 : index
    %c24 = arith.constant 24 : index
    %43 = vector.load %arg8[%c0_29, %c24] : memref<128x36xbf16, #tpu.memory_space<vmem>>, vector<128x4xbf16>
    tpu.vector_store %arg8[%c0_29, %c24], %42 {strides = array<i32>} : memref<128x36xbf16, #tpu.memory_space<vmem>>, vector<128x4xbf16>,
    %c2_i32_30 = arith.constant 2 : i32
    %44 = arith.addi %1, %c2_i32_30 : i32
    %c0_31 = arith.constant 0 : index
    %45 = arith.index_cast %44 : i32 to index
    %c1_32 = arith.constant 1 : index
    %c0_33 = arith.constant 0 : index
    %46 = vector.load %arg2[%c0_31, %45, %c1_32, %c0_33] : memref<1x18x18x4xbf16, #tpu.memory_space<vmem>>, vector<1x8x16x4xbf16>
    %47 = vector.shape_cast %46 : vector<1x8x16x4xbf16> to vector<8x16x4xbf16>
    %48 = vector.shape_cast %47 : vector<8x16x4xbf16> to vector<128x4xbf16>
    %c0_34 = arith.constant 0 : index
    %c28 = arith.constant 28 : index
    %49 = vector.load %arg8[%c0_34, %c28] : memref<128x36xbf16, #tpu.memory_space<vmem>>, vector<128x4xbf16>
    tpu.vector_store %arg8[%c0_34, %c28], %48 {strides = array<i32>} : memref<128x36xbf16, #tpu.memory_space<vmem>>, vector<128x4xbf16>,
    %c2_i32_35 = arith.constant 2 : i32
    %50 = arith.addi %1, %c2_i32_35 : i32
    %c0_36 = arith.constant 0 : index
    %51 = arith.index_cast %50 : i32 to index
    %c2_37 = arith.constant 2 : index
    %c0_38 = arith.constant 0 : index
    %52 = vector.load %arg2[%c0_36, %51, %c2_37, %c0_38] : memref<1x18x18x4xbf16, #tpu.memory_space<vmem>>, vector<1x8x16x4xbf16>
    %53 = vector.shape_cast %52 : vector<1x8x16x4xbf16> to vector<8x16x4xbf16>
    %54 = vector.shape_cast %53 : vector<8x16x4xbf16> to vector<128x4xbf16>
    %c0_39 = arith.constant 0 : index
    %c32 = arith.constant 32 : index
    %55 = vector.load %arg8[%c0_39, %c32] : memref<128x36xbf16, #tpu.memory_space<vmem>>, vector<128x4xbf16>
    tpu.vector_store %arg8[%c0_39, %c32], %54 {strides = array<i32>} : memref<128x36xbf16, #tpu.memory_space<vmem>>, vector<128x4xbf16>,
    %c0_40 = arith.constant 0 : index
    %c0_41 = arith.constant 0 : index
    %56 = vector.load %arg8[%c0_40, %c0_41] : memref<128x36xbf16, #tpu.memory_space<vmem>>, vector<128x36xbf16>
    %c0_42 = arith.constant 0 : index
    %c0_43 = arith.constant 0 : index
    %57 = vector.load %arg3[%c0_42, %c0_43] : memref<36x8xbf16, #tpu.memory_space<vmem>>, vector<36x8xbf16>
    %cst = arith.constant dense<0.000000e+00> : vector<128x8xf32>
    %58 = tpu.matmul %56, %57, %cst {dimension_numbers = #tpu.dot_dimension_numbers<[1], [0], [0], [1], [0, 0, 1, 1], [], []>} : vector<128x36xbf16>, vector<36x8xbf16>, vector<128x8xf32> -> vector<128x8xf32>
    %c0_44 = arith.constant 0 : index
    %c0_45 = arith.constant 0 : index
    %59 = vector.load %arg4[%c0_44, %c0_45] : memref<1x8xf32, #tpu.memory_space<vmem>>, vector<1x8xf32>
    %60 = vector.broadcast %59 : vector<1x8xf32> to vector<128x8xf32>
    %61 = arith.mulf %58, %60 : vector<128x8xf32>
    %c0_46 = arith.constant 0 : index
    %c0_47 = arith.constant 0 : index
    %62 = vector.load %arg5[%c0_46, %c0_47] : memref<1x8xf32, #tpu.memory_space<vmem>>, vector<1x8xf32>
    %63 = vector.broadcast %62 : vector<1x8xf32> to vector<128x8xf32>
    %64 = arith.addf %61, %63 : vector<128x8xf32>
    %c0_48 = arith.constant 0 : index
    %c0_49 = arith.constant 0 : index
    %65 = vector.load %arg6[%c0_48, %c0_49] : memref<1x8xf32, #tpu.memory_space<vmem>>, vector<1x8xf32>
    %66 = vector.broadcast %65 : vector<1x8xf32> to vector<128x8xf32>
    %67 = arith.mulf %64, %66 : vector<128x8xf32>
    %68 = math.tanh %67 : vector<128x8xf32>
    %cst_50 = arith.constant 5.000000e-01 : f32
    %69 = vector.broadcast %cst_50 : f32 to vector<128x8xf32>
    %70 = arith.mulf %69, %68 : vector<128x8xf32>
    %cst_51 = arith.constant 5.000000e-01 : f32
    %71 = vector.broadcast %cst_51 : f32 to vector<128x8xf32>
    %72 = arith.addf %70, %71 : vector<128x8xf32>
    %73 = arith.mulf %64, %72 : vector<128x8xf32>
    %74 = vector.shape_cast %73 : vector<128x8xf32> to vector<8x16x8xf32>
    %c0_52 = arith.constant 0 : index
    %c0_53 = arith.constant 0 : index
    %c0_54 = arith.constant 0 : index
    %75 = vector.load %arg9[%c0_52, %c0_53, %c0_54] : memref<8x16x8xf32, #tpu.memory_space<vmem>>, vector<8x16x8xf32>
    tpu.vector_store %arg9[%c0_52, %c0_53, %c0_54], %74 {strides = array<i32>} : memref<8x16x8xf32, #tpu.memory_space<vmem>>, vector<8x16x8xf32>,
    %c0_55 = arith.constant 0 : index
    %c0_56 = arith.constant 0 : index
    %c0_57 = arith.constant 0 : index
    %76 = vector.load %arg9[%c0_55, %c0_56, %c0_57] : memref<8x16x8xf32, #tpu.memory_space<vmem>>, vector<8x1x8xf32>
    %77 = vector.shape_cast %76 : vector<8x1x8xf32> to vector<8x8xf32>
    %c0_58 = arith.constant 0 : index
    %c0_59 = arith.constant 0 : index
    %c0_60 = arith.constant 0 : index
    %78 = vector.load %arg7[%c0_58, %c0_59, %c0_60] : memref<1x8x128xf32, #tpu.memory_space<vmem>>, vector<1x8x8xf32>
    %79 = vector.shape_cast %78 : vector<1x8x8xf32> to vector<8x8xf32>
    %80 = vector.shape_cast %77 : vector<8x8xf32> to vector<1x8x8xf32>
    tpu.vector_store %arg7[%c0_58, %c0_59, %c0_60], %80 {strides = array<i32>} : memref<1x8x128xf32, #tpu.memory_space<vmem>>, vector<1x8x8xf32>,
    %c0_61 = arith.constant 0 : index
    %c1_62 = arith.constant 1 : index
    %c0_63 = arith.constant 0 : index
    %81 = vector.load %arg9[%c0_61, %c1_62, %c0_63] : memref<8x16x8xf32, #tpu.memory_space<vmem>>, vector<8x1x8xf32>
    %82 = vector.shape_cast %81 : vector<8x1x8xf32> to vector<8x8xf32>
    %c0_64 = arith.constant 0 : index
    %c0_65 = arith.constant 0 : index
    %c8_66 = arith.constant 8 : index
    %83 = vector.load %arg7[%c0_64, %c0_65, %c8_66] : memref<1x8x128xf32, #tpu.memory_space<vmem>>, vector<1x8x8xf32>
    %84 = vector.shape_cast %83 : vector<1x8x8xf32> to vector<8x8xf32>
    %85 = vector.shape_cast %82 : vector<8x8xf32> to vector<1x8x8xf32>
    tpu.vector_store %arg7[%c0_64, %c0_65, %c8_66], %85 {strides = array<i32>} : memref<1x8x128xf32, #tpu.memory_space<vmem>>, vector<1x8x8xf32>,
    %c0_67 = arith.constant 0 : index
    %c2_68 = arith.constant 2 : index
    %c0_69 = arith.constant 0 : index
    %86 = vector.load %arg9[%c0_67, %c2_68, %c0_69] : memref<8x16x8xf32, #tpu.memory_space<vmem>>, vector<8x1x8xf32>
    %87 = vector.shape_cast %86 : vector<8x1x8xf32> to vector<8x8xf32>
    %c0_70 = arith.constant 0 : index
    %c0_71 = arith.constant 0 : index
    %c16_72 = arith.constant 16 : index
    %88 = vector.load %arg7[%c0_70, %c0_71, %c16_72] : memref<1x8x128xf32, #tpu.memory_space<vmem>>, vector<1x8x8xf32>
    %89 = vector.shape_cast %88 : vector<1x8x8xf32> to vector<8x8xf32>
    %90 = vector.shape_cast %87 : vector<8x8xf32> to vector<1x8x8xf32>
    tpu.vector_store %arg7[%c0_70, %c0_71, %c16_72], %90 {strides = array<i32>} : memref<1x8x128xf32, #tpu.memory_space<vmem>>, vector<1x8x8xf32>,
    %c0_73 = arith.constant 0 : index
    %c3 = arith.constant 3 : index
    %c0_74 = arith.constant 0 : index
    %91 = vector.load %arg9[%c0_73, %c3, %c0_74] : memref<8x16x8xf32, #tpu.memory_space<vmem>>, vector<8x1x8xf32>
    %92 = vector.shape_cast %91 : vector<8x1x8xf32> to vector<8x8xf32>
    %c0_75 = arith.constant 0 : index
    %c0_76 = arith.constant 0 : index
    %c24_77 = arith.constant 24 : index
    %93 = vector.load %arg7[%c0_75, %c0_76, %c24_77] : memref<1x8x128xf32, #tpu.memory_space<vmem>>, vector<1x8x8xf32>
    %94 = vector.shape_cast %93 : vector<1x8x8xf32> to vector<8x8xf32>
    %95 = vector.shape_cast %92 : vector<8x8xf32> to vector<1x8x8xf32>
    tpu.vector_store %arg7[%c0_75, %c0_76, %c24_77], %95 {strides = array<i32>} : memref<1x8x128xf32, #tpu.memory_space<vmem>>, vector<1x8x8xf32>,
    %c0_78 = arith.constant 0 : index
    %c4_79 = arith.constant 4 : index
    %c0_80 = arith.constant 0 : index
    %96 = vector.load %arg9[%c0_78, %c4_79, %c0_80] : memref<8x16x8xf32, #tpu.memory_space<vmem>>, vector<8x1x8xf32>
    %97 = vector.shape_cast %96 : vector<8x1x8xf32> to vector<8x8xf32>
    %c0_81 = arith.constant 0 : index
    %c0_82 = arith.constant 0 : index
    %c32_83 = arith.constant 32 : index
    %98 = vector.load %arg7[%c0_81, %c0_82, %c32_83] : memref<1x8x128xf32, #tpu.memory_space<vmem>>, vector<1x8x8xf32>
    %99 = vector.shape_cast %98 : vector<1x8x8xf32> to vector<8x8xf32>
    %100 = vector.shape_cast %97 : vector<8x8xf32> to vector<1x8x8xf32>
    tpu.vector_store %arg7[%c0_81, %c0_82, %c32_83], %100 {strides = array<i32>} : memref<1x8x128xf32, #tpu.memory_space<vmem>>, vector<1x8x8xf32>,
    %c0_84 = arith.constant 0 : index
    %c5 = arith.constant 5 : index
    %c0_85 = arith.constant 0 : index
    %101 = vector.load %arg9[%c0_84, %c5, %c0_85] : memref<8x16x8xf32, #tpu.memory_space<vmem>>, vector<8x1x8xf32>
    %102 = vector.shape_cast %101 : vector<8x1x8xf32> to vector<8x8xf32>
    %c0_86 = arith.constant 0 : index
    %c0_87 = arith.constant 0 : index
    %c40 = arith.constant 40 : index
    %103 = vector.load %arg7[%c0_86, %c0_87, %c40] : memref<1x8x128xf32, #tpu.memory_space<vmem>>, vector<1x8x8xf32>
    %104 = vector.shape_cast %103 : vector<1x8x8xf32> to vector<8x8xf32>
    %105 = vector.shape_cast %102 : vector<8x8xf32> to vector<1x8x8xf32>
    tpu.vector_store %arg7[%c0_86, %c0_87, %c40], %105 {strides = array<i32>} : memref<1x8x128xf32, #tpu.memory_space<vmem>>, vector<1x8x8xf32>,
    %c0_88 = arith.constant 0 : index
    %c6 = arith.constant 6 : index
    %c0_89 = arith.constant 0 : index
    %106 = vector.load %arg9[%c0_88, %c6, %c0_89] : memref<8x16x8xf32, #tpu.memory_space<vmem>>, vector<8x1x8xf32>
    %107 = vector.shape_cast %106 : vector<8x1x8xf32> to vector<8x8xf32>
    %c0_90 = arith.constant 0 : index
    %c0_91 = arith.constant 0 : index
    %c48 = arith.constant 48 : index
    %108 = vector.load %arg7[%c0_90, %c0_91, %c48] : memref<1x8x128xf32, #tpu.memory_space<vmem>>, vector<1x8x8xf32>
    %109 = vector.shape_cast %108 : vector<1x8x8xf32> to vector<8x8xf32>
    %110 = vector.shape_cast %107 : vector<8x8xf32> to vector<1x8x8xf32>
    tpu.vector_store %arg7[%c0_90, %c0_91, %c48], %110 {strides = array<i32>} : memref<1x8x128xf32, #tpu.memory_space<vmem>>, vector<1x8x8xf32>,
    %c0_92 = arith.constant 0 : index
    %c7 = arith.constant 7 : index
    %c0_93 = arith.constant 0 : index
    %111 = vector.load %arg9[%c0_92, %c7, %c0_93] : memref<8x16x8xf32, #tpu.memory_space<vmem>>, vector<8x1x8xf32>
    %112 = vector.shape_cast %111 : vector<8x1x8xf32> to vector<8x8xf32>
    %c0_94 = arith.constant 0 : index
    %c0_95 = arith.constant 0 : index
    %c56 = arith.constant 56 : index
    %113 = vector.load %arg7[%c0_94, %c0_95, %c56] : memref<1x8x128xf32, #tpu.memory_space<vmem>>, vector<1x8x8xf32>
    %114 = vector.shape_cast %113 : vector<1x8x8xf32> to vector<8x8xf32>
    %115 = vector.shape_cast %112 : vector<8x8xf32> to vector<1x8x8xf32>
    tpu.vector_store %arg7[%c0_94, %c0_95, %c56], %115 {strides = array<i32>} : memref<1x8x128xf32, #tpu.memory_space<vmem>>, vector<1x8x8xf32>,
    %c0_96 = arith.constant 0 : index
    %c8_97 = arith.constant 8 : index
    %c0_98 = arith.constant 0 : index
    %116 = vector.load %arg9[%c0_96, %c8_97, %c0_98] : memref<8x16x8xf32, #tpu.memory_space<vmem>>, vector<8x1x8xf32>
    %117 = vector.shape_cast %116 : vector<8x1x8xf32> to vector<8x8xf32>
    %c0_99 = arith.constant 0 : index
    %c0_100 = arith.constant 0 : index
    %c64 = arith.constant 64 : index
    %118 = vector.load %arg7[%c0_99, %c0_100, %c64] : memref<1x8x128xf32, #tpu.memory_space<vmem>>, vector<1x8x8xf32>
    %119 = vector.shape_cast %118 : vector<1x8x8xf32> to vector<8x8xf32>
    %120 = vector.shape_cast %117 : vector<8x8xf32> to vector<1x8x8xf32>
    tpu.vector_store %arg7[%c0_99, %c0_100, %c64], %120 {strides = array<i32>} : memref<1x8x128xf32, #tpu.memory_space<vmem>>, vector<1x8x8xf32>,
    %c0_101 = arith.constant 0 : index
    %c9 = arith.constant 9 : index
    %c0_102 = arith.constant 0 : index
    %121 = vector.load %arg9[%c0_101, %c9, %c0_102] : memref<8x16x8xf32, #tpu.memory_space<vmem>>, vector<8x1x8xf32>
    %122 = vector.shape_cast %121 : vector<8x1x8xf32> to vector<8x8xf32>
    %c0_103 = arith.constant 0 : index
    %c0_104 = arith.constant 0 : index
    %c72 = arith.constant 72 : index
    %123 = vector.load %arg7[%c0_103, %c0_104, %c72] : memref<1x8x128xf32, #tpu.memory_space<vmem>>, vector<1x8x8xf32>
    %124 = vector.shape_cast %123 : vector<1x8x8xf32> to vector<8x8xf32>
    %125 = vector.shape_cast %122 : vector<8x8xf32> to vector<1x8x8xf32>
    tpu.vector_store %arg7[%c0_103, %c0_104, %c72], %125 {strides = array<i32>} : memref<1x8x128xf32, #tpu.memory_space<vmem>>, vector<1x8x8xf32>,
    %c0_105 = arith.constant 0 : index
    %c10 = arith.constant 10 : index
    %c0_106 = arith.constant 0 : index
    %126 = vector.load %arg9[%c0_105, %c10, %c0_106] : memref<8x16x8xf32, #tpu.memory_space<vmem>>, vector<8x1x8xf32>
    %127 = vector.shape_cast %126 : vector<8x1x8xf32> to vector<8x8xf32>
    %c0_107 = arith.constant 0 : index
    %c0_108 = arith.constant 0 : index
    %c80 = arith.constant 80 : index
    %128 = vector.load %arg7[%c0_107, %c0_108, %c80] : memref<1x8x128xf32, #tpu.memory_space<vmem>>, vector<1x8x8xf32>
    %129 = vector.shape_cast %128 : vector<1x8x8xf32> to vector<8x8xf32>
    %130 = vector.shape_cast %127 : vector<8x8xf32> to vector<1x8x8xf32>
    tpu.vector_store %arg7[%c0_107, %c0_108, %c80], %130 {strides = array<i32>} : memref<1x8x128xf32, #tpu.memory_space<vmem>>, vector<1x8x8xf32>,
    %c0_109 = arith.constant 0 : index
    %c11 = arith.constant 11 : index
    %c0_110 = arith.constant 0 : index
    %131 = vector.load %arg9[%c0_109, %c11, %c0_110] : memref<8x16x8xf32, #tpu.memory_space<vmem>>, vector<8x1x8xf32>
    %132 = vector.shape_cast %131 : vector<8x1x8xf32> to vector<8x8xf32>
    %c0_111 = arith.constant 0 : index
    %c0_112 = arith.constant 0 : index
    %c88 = arith.constant 88 : index
    %133 = vector.load %arg7[%c0_111, %c0_112, %c88] : memref<1x8x128xf32, #tpu.memory_space<vmem>>, vector<1x8x8xf32>
    %134 = vector.shape_cast %133 : vector<1x8x8xf32> to vector<8x8xf32>
    %135 = vector.shape_cast %132 : vector<8x8xf32> to vector<1x8x8xf32>
    tpu.vector_store %arg7[%c0_111, %c0_112, %c88], %135 {strides = array<i32>} : memref<1x8x128xf32, #tpu.memory_space<vmem>>, vector<1x8x8xf32>,
    %c0_113 = arith.constant 0 : index
    %c12_114 = arith.constant 12 : index
    %c0_115 = arith.constant 0 : index
    %136 = vector.load %arg9[%c0_113, %c12_114, %c0_115] : memref<8x16x8xf32, #tpu.memory_space<vmem>>, vector<8x1x8xf32>
    %137 = vector.shape_cast %136 : vector<8x1x8xf32> to vector<8x8xf32>
    %c0_116 = arith.constant 0 : index
    %c0_117 = arith.constant 0 : index
    %c96 = arith.constant 96 : index
    %138 = vector.load %arg7[%c0_116, %c0_117, %c96] : memref<1x8x128xf32, #tpu.memory_space<vmem>>, vector<1x8x8xf32>
    %139 = vector.shape_cast %138 : vector<1x8x8xf32> to vector<8x8xf32>
    %140 = vector.shape_cast %137 : vector<8x8xf32> to vector<1x8x8xf32>
    tpu.vector_store %arg7[%c0_116, %c0_117, %c96], %140 {strides = array<i32>} : memref<1x8x128xf32, #tpu.memory_space<vmem>>, vector<1x8x8xf32>,
    %c0_118 = arith.constant 0 : index
    %c13 = arith.constant 13 : index
    %c0_119 = arith.constant 0 : index
    %141 = vector.load %arg9[%c0_118, %c13, %c0_119] : memref<8x16x8xf32, #tpu.memory_space<vmem>>, vector<8x1x8xf32>
    %142 = vector.shape_cast %141 : vector<8x1x8xf32> to vector<8x8xf32>
    %c0_120 = arith.constant 0 : index
    %c0_121 = arith.constant 0 : index
    %c104 = arith.constant 104 : index
    %143 = vector.load %arg7[%c0_120, %c0_121, %c104] : memref<1x8x128xf32, #tpu.memory_space<vmem>>, vector<1x8x8xf32>
    %144 = vector.shape_cast %143 : vector<1x8x8xf32> to vector<8x8xf32>
    %145 = vector.shape_cast %142 : vector<8x8xf32> to vector<1x8x8xf32>
    tpu.vector_store %arg7[%c0_120, %c0_121, %c104], %145 {strides = array<i32>} : memref<1x8x128xf32, #tpu.memory_space<vmem>>, vector<1x8x8xf32>,
    %c0_122 = arith.constant 0 : index
    %c14 = arith.constant 14 : index
    %c0_123 = arith.constant 0 : index
    %146 = vector.load %arg9[%c0_122, %c14, %c0_123] : memref<8x16x8xf32, #tpu.memory_space<vmem>>, vector<8x1x8xf32>
    %147 = vector.shape_cast %146 : vector<8x1x8xf32> to vector<8x8xf32>
    %c0_124 = arith.constant 0 : index
    %c0_125 = arith.constant 0 : index
    %c112 = arith.constant 112 : index
    %148 = vector.load %arg7[%c0_124, %c0_125, %c112] : memref<1x8x128xf32, #tpu.memory_space<vmem>>, vector<1x8x8xf32>
    %149 = vector.shape_cast %148 : vector<1x8x8xf32> to vector<8x8xf32>
    %150 = vector.shape_cast %147 : vector<8x8xf32> to vector<1x8x8xf32>
    tpu.vector_store %arg7[%c0_124, %c0_125, %c112], %150 {strides = array<i32>} : memref<1x8x128xf32, #tpu.memory_space<vmem>>, vector<1x8x8xf32>,
    %c0_126 = arith.constant 0 : index
    %c15 = arith.constant 15 : index
    %c0_127 = arith.constant 0 : index
    %151 = vector.load %arg9[%c0_126, %c15, %c0_127] : memref<8x16x8xf32, #tpu.memory_space<vmem>>, vector<8x1x8xf32>
    %152 = vector.shape_cast %151 : vector<8x1x8xf32> to vector<8x8xf32>
    %c0_128 = arith.constant 0 : index
    %c0_129 = arith.constant 0 : index
    %c120 = arith.constant 120 : index
    %153 = vector.load %arg7[%c0_128, %c0_129, %c120] : memref<1x8x128xf32, #tpu.memory_space<vmem>>, vector<1x8x8xf32>
    %154 = vector.shape_cast %153 : vector<1x8x8xf32> to vector<8x8xf32>
    %155 = vector.shape_cast %152 : vector<8x8xf32> to vector<1x8x8xf32>
    tpu.vector_store %arg7[%c0_128, %c0_129, %c120], %155 {strides = array<i32>} : memref<1x8x128xf32, #tpu.memory_space<vmem>>, vector<1x8x8xf32>,
    return
  }
  func.func @transform_0(%arg0: i32, %arg1: i32) -> (i32, i32, i32, i32) {
    %c0_i32 = arith.constant 0 : i32
    %c0_i32_0 = arith.constant 0 : i32
    %c0_i32_1 = arith.constant 0 : i32
    %c0_i32_2 = arith.constant 0 : i32
    return %arg0, %c0_i32, %c0_i32_0, %c0_i32_1 : i32, i32, i32, i32
  }
  func.func @transform_1(%arg0: i32, %arg1: i32) -> (i32, i32) {
    %c0_i32 = arith.constant 0 : i32
    %c0_i32_0 = arith.constant 0 : i32
    %c0_i32_1 = arith.constant 0 : i32
    return %c0_i32, %c0_i32_0 : i32, i32
  }
  func.func @transform_2(%arg0: i32, %arg1: i32) -> (i32, i32) {
    %c0_i32 = arith.constant 0 : i32
    %c0_i32_0 = arith.constant 0 : i32
    %c0_i32_1 = arith.constant 0 : i32
    return %c0_i32, %c0_i32_0 : i32, i32
  }
  func.func @transform_3(%arg0: i32, %arg1: i32) -> (i32, i32) {
    %c0_i32 = arith.constant 0 : i32
    %c0_i32_0 = arith.constant 0 : i32
    %c0_i32_1 = arith.constant 0 : i32
    return %c0_i32, %c0_i32_0 : i32, i32
  }
  func.func @transform_4(%arg0: i32, %arg1: i32) -> (i32, i32) {
    %c0_i32 = arith.constant 0 : i32
    %c0_i32_0 = arith.constant 0 : i32
    %c0_i32_1 = arith.constant 0 : i32
    return %c0_i32, %c0_i32_0 : i32, i32
  }
  func.func @transform_5(%arg0: i32, %arg1: i32) -> (i32, i32, i32) {
    %c0_i32 = arith.constant 0 : i32
    %c0_i32_0 = arith.constant 0 : i32
    return %arg0, %arg1, %c0_i32 : i32, i32, i32
  }
}

</mosaic_0001>

<llo_original>
// kernel: tpu_custom_call.1
$region0: #{tpu_custom_call.1}
  #allocation0 [shape = 'u32[]', space=smem, size = 0x4, offset = 0x4, fixed_abs, tag = 'smem constant byte address 0x4 - core index']
  #allocation1 [shape = 'u32[144,128]{1,0:T(1,128)}', space=vmem, size = 0x12000, scoped, tag = 'internal scratch']
  #allocation2 [shape = 'bf16[128,36]{1,0:T(8,128)(2,1)}', space=vmem, size = 0x8000, scoped, tag = 'scratch operand']
  #allocation3 [shape = 'f32[8,16,8]{2,1,0:T(8,128)}', space=vmem, size = 0x10000, scoped, tag = 'scratch operand']
  %s0 = inlined_call_operand.vmem [shape: bf16[2,18,18,4], index: 0, kind: input, shape index: {}]
  %s1 = inlined_call_operand.vmem [shape: bf16[36,8], index: 1, kind: input, shape index: {}]
  %s2 = inlined_call_operand.vmem [shape: f32[1,8], index: 2, kind: input, shape index: {}]
  %s3 = inlined_call_operand.vmem [shape: f32[1,8], index: 3, kind: input, shape index: {}]
  %s4 = inlined_call_operand.vmem [shape: f32[1,8], index: 4, kind: input, shape index: {}]
  %s5 = inlined_call_operand.hbm [shape: f32[2,16,128], index: 5, kind: output, shape index: {}]
  %s6 = sld [smem:[#allocation0]]
  $region53: #{tpu_custom_call.1} parent=0
    _
  %s8 = ssub.s32 1, %s6
  %s9 = scalar_select 0, %s8, %s6
  $region1: #{tpu_custom_call.1} parent=0
    #allocation4 [shape = 'u8[8192]{0}', space=vmem, size = 0x2000, scoped, tag = 'output window, operand 0']
    #allocation5 [shape = 's32[2]{0}', space=sflag, size = 0x8, scoped, tag = 'scoped memory for tpu_custom_call.1']
    %10 = vsyncpa [#allocation5], 0
    %s11 = scalar_lea.sflag [#allocation5], 1
    %12 = vsyncpa %s11, 0
    loop: start=0, step=1, limit=6
    $region2: #{tpu_custom_call.1} parent=1 // loop_pre_header
      _
    $region3: #{tpu_custom_call.1} parent=1 // loop_header
      %s14 = sphi 0, %s18
      %p15 = scmp.ge.s32.totalorder %s14, 6
      %s21 = sphi 0, %s33
      %s22 = sphi 0, %s29
      %s23 = sphi 0, %s21
      %s24 = sphi 0, %s22
      %s25 = sphi 0, %s23
      %s26 = sphi 0, %s24
      %s36 = sphi 0, %s38
      %s39 = sphi 0, %s36
      %s40 = sphi 0, %s39
      %s56 = sphi 0, %s40
      %s60 = sphi 0, %s60
      %s62 = sphi 0, %s60
      %s63 = sphi 0, %s62
      %s77 = sphi 0, %s63
      %s81 = sphi 0, %s81
      %s83 = sphi 0, %s81
      %s84 = sphi 0, %s83
      %s98 = sphi 0, %s84
      %s102 = sphi 0, %s102
      %s104 = sphi 0, %s102
      %s105 = sphi 0, %s104
      %s119 = sphi 0, %s105
      %s123 = sphi 0, %s123
      %s125 = sphi 0, %s123
      %s126 = sphi 0, %s125
      %s140 = sphi 0, %s126
      %s148 = sphi 0, %s150
      %s151 = sphi 0, %s148
      %s152 = sphi 0, %s151
      %s168 = sphi 0, %s152
    $region4: #{tpu_custom_call.1} parent=1 // loop_header_branch
      %17 = sbr.rel (%p15) target = $region8
    $region5: #{tpu_custom_call.1} parent=1 // loop_body
      %s19 = ssub.s32 %s14, 1
      %s20 = ssub.s32 %s14, 2
      %s27 = sadd.s32 1, %s22
      %p28 = scmp.ge.s32.totalorder %s27, 2
      %s29 = scalar_select %p28, 0, %s27
      %s30 = sadd.s32 1, %s21
      %s31 = scalar_select %p28, %s30, %s21
      %p32 = scmp.ge.s32.totalorder %s31, 2
      %s33 = scalar_select %p32, 0, %s31
      %s34 = ssub.s32 %s21, %s33
      %p35 = scmp.eq.s32.totalorder %s34, 0
      %s37 = sadd.s32 %s36, 1
      %s38 = scalar_select %p35, %s36, %s37
      %p41 = pneg %p35
      %p42 = scmp.eq.s32.totalorder %s14, 3
      %p43 = por %p41, %p42
      %p44 = scmp.ne.s32.totalorder %s36, %s39
      %p45 = scmp.eq.s32.totalorder %s14, 0
      %p46 = por %p44, %p45
      %p47 = scmp.ne.s32.totalorder %s36, %s39
      %p48 = scmp.eq.s32.totalorder %s19, 3
      %p49 = por %p47, %p48
      %p50 = scmp.ne.s32.totalorder %s39, %s40
      %p51 = scmp.eq.s32.totalorder %s19, 0
      %p52 = por %p50, %p51
      %p53 = scmp.ne.s32.totalorder %s39, %s40
      %p54 = scmp.eq.s32.totalorder %s20, 3
      %p55 = por %p53, %p54
      %p57 = scmp.ne.s32.totalorder %s40, %s56
      %p58 = scmp.eq.s32.totalorder %s20, 0
      %p59 = por %p57, %p58
      %s61 = sadd.s32 %s60, 1
      %p64 = scmp.eq.s32.totalorder %s14, 3
      %p65 = scmp.ne.s32.totalorder %s60, %s62
      %p66 = scmp.eq.s32.totalorder %s14, 0
      %p67 = por %p65, %p66
      %p68 = scmp.ne.s32.totalorder %s60, %s62
      %p69 = scmp.eq.s32.totalorder %s19, 3
      %p70 = por %p68, %p69
      %p71 = scmp.ne.s32.totalorder %s62, %s63
      %p72 = scmp.eq.s32.totalorder %s19, 0
      %p73 = por %p71, %p72
      %p74 = scmp.ne.s32.totalorder %s62, %s63
      %p75 = scmp.eq.s32.totalorder %s20, 3
      %p76 = por %p74, %p75
      %p78 = scmp.ne.s32.totalorder %s63, %s77
      %p79 = scmp.eq.s32.totalorder %s20, 0
      %p80 = por %p78, %p79
      %s82 = sadd.s32 %s81, 1
      %p85 = scmp.eq.s32.totalorder %s14, 3
      %p86 = scmp.ne.s32.totalorder %s81, %s83
      %p87 = scmp.eq.s32.totalorder %s14, 0
      %p88 = por %p86, %p87
      %p89 = scmp.ne.s32.totalorder %s81, %s83
      %p90 = scmp.eq.s32.totalorder %s19, 3
      %p91 = por %p89, %p90
      %p92 = scmp.ne.s32.totalorder %s83, %s84
      %p93 = scmp.eq.s32.totalorder %s19, 0
      %p94 = por %p92, %p93
      %p95 = scmp.ne.s32.totalorder %s83, %s84
      %p96 = scmp.eq.s32.totalorder %s20, 3
      %p97 = por %p95, %p96
      %p99 = scmp.ne.s32.totalorder %s84, %s98
      %p100 = scmp.eq.s32.totalorder %s20, 0
      %p101 = por %p99, %p100
      %s103 = sadd.s32 %s102, 1
      %p106 = scmp.eq.s32.totalorder %s14, 3
      %p107 = scmp.ne.s32.totalorder %s102, %s104
      %p108 = scmp.eq.s32.totalorder %s14, 0
      %p109 = por %p107, %p108
      %p110 = scmp.ne.s32.totalorder %s102, %s104
      %p111 = scmp.eq.s32.totalorder %s19, 3
      %p112 = por %p110, %p111
      %p113 = scmp.ne.s32.totalorder %s104, %s105
      %p114 = scmp.eq.s32.totalorder %s19, 0
      %p115 = por %p113, %p114
      %p116 = scmp.ne.s32.totalorder %s104, %s105
      %p117 = scmp.eq.s32.totalorder %s20, 3
      %p118 = por %p116, %p117
      %p120 = scmp.ne.s32.totalorder %s105, %s119
      %p121 = scmp.eq.s32.totalorder %s20, 0
      %p122 = por %p120, %p121
      %s124 = sadd.s32 %s123, 1
      %p127 = scmp.eq.s32.totalorder %s14, 3
      %p128 = scmp.ne.s32.totalorder %s123, %s125
      %p129 = scmp.eq.s32.totalorder %s14, 0
      %p130 = por %p128, %p129
      %p131 = scmp.ne.s32.totalorder %s123, %s125
      %p132 = scmp.eq.s32.totalorder %s19, 3
      %p133 = por %p131, %p132
      %p134 = scmp.ne.s32.totalorder %s125, %s126
      %p135 = scmp.eq.s32.totalorder %s19, 0
      %p136 = por %p134, %p135
      %p137 = scmp.ne.s32.totalorder %s125, %s126
      %p138 = scmp.eq.s32.totalorder %s20, 3
      %p139 = por %p137, %p138
      %p141 = scmp.ne.s32.totalorder %s126, %s140
      %p142 = scmp.eq.s32.totalorder %s20, 0
      %p143 = por %p141, %p142
      %s144 = ssub.s32 %s21, %s33
      %s145 = ssub.s32 %s22, %s29
      %s146 = sor.u32 %s144, %s145
      %p147 = scmp.eq.s32.totalorder %s146, 0
      %s149 = sadd.s32 %s148, 1
      %s150 = scalar_select %p147, %s148, %s149
      %p153 = pneg %p147
      %p154 = scmp.eq.s32.totalorder %s14, 3
      %p155 = por %p153, %p154
      %p156 = scmp.ne.s32.totalorder %s148, %s151
      %p157 = scmp.eq.s32.totalorder %s14, 0
      %p158 = por %p156, %p157
      %p159 = scmp.ne.s32.totalorder %s148, %s151
      %p160 = scmp.eq.s32.totalorder %s19, 3
      %p161 = por %p159, %p160
      %p162 = scmp.ne.s32.totalorder %s151, %s152
      %p163 = scmp.eq.s32.totalorder %s19, 0
      %p164 = por %p162, %p163
      %p165 = scmp.ne.s32.totalorder %s151, %s152
      %p166 = scmp.eq.s32.totalorder %s20, 3
      %p167 = por %p165, %p166
      %p169 = scmp.ne.s32.totalorder %s152, %s168
      %p170 = scmp.eq.s32.totalorder %s20, 0
      %p171 = por %p169, %p170
      %p172 = scmp.le.s32.totalorder 1, %s14
      %p173 = scmp.lt.s32.totalorder %s14, 5
      %p174 = pnand %p172, %p173
      %p175 = pneg %p174
      // Predicated region
      $region9: #{tpu_custom_call.1} parent=5 // pred_check
        _
      $region10: #{tpu_custom_call.1} parent=5 // pred_check_branch
        %177 = sbr.rel (%p174) target = $region12
      $region11: #{tpu_custom_call.1} parent=5 // pred_region
        %s178 = ssub.s32 %s14, 1
        // Predicated region
        $region13: #{tpu_custom_call.1} parent=11 // pred_check
          %p179 = pneg %p73
        $region14: #{tpu_custom_call.1} parent=11 // pred_check_branch
          %181 = sbr.rel (%p179) target = $region16
        $region15: #{tpu_custom_call.1} parent=11 // pred_region
          _
        $region16: #{tpu_custom_call.1} parent=11 // pred_fallthru
          _
        // Predicated region
        $region17: #{tpu_custom_call.1} parent=11 // pred_check
          %p182 = pneg %p94
        $region18: #{tpu_custom_call.1} parent=11 // pred_check_branch
          %184 = sbr.rel (%p182) target = $region20
        $region19: #{tpu_custom_call.1} parent=11 // pred_region
          _
        $region20: #{tpu_custom_call.1} parent=11 // pred_fallthru
          _
        // Predicated region
        $region21: #{tpu_custom_call.1} parent=11 // pred_check
          %p185 = pneg %p115
        $region22: #{tpu_custom_call.1} parent=11 // pred_check_branch
          %187 = sbr.rel (%p185) target = $region24
        $region23: #{tpu_custom_call.1} parent=11 // pred_region
          _
        $region24: #{tpu_custom_call.1} parent=11 // pred_fallthru
          _
        // Predicated region
        $region25: #{tpu_custom_call.1} parent=11 // pred_check
          %p188 = pneg %p136
        $region26: #{tpu_custom_call.1} parent=11 // pred_check_branch
          %190 = sbr.rel (%p188) target = $region28
        $region27: #{tpu_custom_call.1} parent=11 // pred_region
          _
        $region28: #{tpu_custom_call.1} parent=11 // pred_fallthru
          _
      $region12: #{tpu_custom_call.1} parent=5 // pred_fallthru
        _
      %p191 = scmp.lt.s32.totalorder %s14, 4
      // Predicated region
      $region29: #{tpu_custom_call.1} parent=5 // pred_check
        %p192 = pneg %p191
      $region30: #{tpu_custom_call.1} parent=5 // pred_check_branch
        %194 = sbr.rel (%p192) target = $region32
      $region31: #{tpu_custom_call.1} parent=5 // pred_region
        // Predicated region
        $region33: #{tpu_custom_call.1} parent=31 // pred_check
          %p195 = pneg %p46
        $region34: #{tpu_custom_call.1} parent=31 // pred_check_branch
          %197 = sbr.rel (%p195) target = $region36
        $region35: #{tpu_custom_call.1} parent=31 // pred_region
          %p198 = scmp.lt.s32.totalorder %s21, 1
          %s199 = scalar_select %p198, %s21, 1
          %s200 = smul.addr %s199, 54
          %s201 = smul.addr %s200, 4
          %s202 = scalar_lea.vmem %s0, %s201
        $region36: #{tpu_custom_call.1} parent=31 // pred_fallthru
          _
      $region32: #{tpu_custom_call.1} parent=5 // pred_fallthru
        _
      %p203 = scmp.le.s32.totalorder 1, %s14
      %p204 = scmp.lt.s32.totalorder %s14, 5
      %p205 = pnand %p203, %p204
      %p206 = pneg %p205
      // Predicated region
      $region37: #{tpu_custom_call.1} parent=5 // pred_check
        _
      $region38: #{tpu_custom_call.1} parent=5 // pred_check_branch
        %208 = sbr.rel (%p205) target = $region40
      $region39: #{tpu_custom_call.1} parent=5 // pred_region
        %s209 = ssub.s32 %s14, 1
        %p210 = scmp.lt.s32.totalorder %s23, 1
        %s211 = scalar_select %p210, %s23, 1
        %s212 = smul.addr %s211, 54
        %s213 = smul.addr %s212, 4
        %s214 = scalar_lea.vmem %s0, %s213
        %p215 = pneg %p52
        %p216 = pneg %p49
        %p217 = pneg %p73
        %p218 = pneg %p70
        %p219 = pneg %p94
        %p220 = pneg %p91
        %p221 = pneg %p115
        %p222 = pneg %p112
        %p223 = pneg %p136
        %p224 = pneg %p133
        %p225 = pneg %p164
        %p226 = pneg %p161
        %s227 = sand.u32 %s151, 1
        %s228 = scalar_lea.sflag [#allocation5], %s227
        %s229 = sand.u32 %s151, 1
        %s230 = smul.addr %s229, 8
        %s231 = scalar_lea.vmem [#allocation4], %s230
        %p232 = scmp.lt.s32.totalorder %s23, 1
        %s233 = scalar_select %p232, %s23, 1
        %s234 = smul.addr %s233, 54
        %s235 = smul.addr %s234, 4
        %s236 = scalar_lea.vmem %s0, %s235
        %s238 = smul.u32 %s24, 8
        %s239 = smul.u32 %s238, 3
        %s240 = smul.addr %s239, 4
        %s241 = scalar_lea.vmem %s236, %s240
        %v242 = vld [vmem:[%s241] sm:$0xf]
        %v243 = vld [vmem:[%s241 + $0x4] sm:$0xf]
        %v244 = vld [vmem:[%s241 + $0xc] sm:$0xf]
        %v245 = vld [vmem:[%s241 + $0x10] sm:$0xf]
        %v246 = vld [vmem:[%s241 + $0x18] sm:$0xf]
        %v247 = vld [vmem:[%s241 + $0x1c] sm:$0xf]
        %v248 = vld [vmem:[%s241 + $0x24] sm:$0xf]
        %v249 = vld [vmem:[%s241 + $0x28] sm:$0xf]
        %v250 = vld [vmem:[%s241 + $0x30] sm:$0xf]
        %v251 = vld [vmem:[%s241 + $0x34] sm:$0xf]
        %v252 = vld [vmem:[%s241 + $0x3c] sm:$0xf]
        %v253 = vld [vmem:[%s241 + $0x40] sm:$0xf]
        %v254 = vld [vmem:[%s241 + $0x48] sm:$0xf]
        %v255 = vld [vmem:[%s241 + $0x4c] sm:$0xf]
        %v256 = vld [vmem:[%s241 + $0x54] sm:$0xf]
        %v257 = vld [vmem:[%s241 + $0x58] sm:$0xf]
        %vm258 = vcmask 27648
        %259 = vst.msk [vmem:[#allocation2] sm:$0xf] %vm258, %v242
        %260 = vst.msk [vmem:[#allocation2 + $0x4] sm:$0xf] %vm258, %v243
        %261 = vst.msk [vmem:[#allocation2 + $0x8] sm:$0xf] %vm258, %v244
        %262 = vst.msk [vmem:[#allocation2 + $0xc] sm:$0xf] %vm258, %v245
        %263 = vst.msk [vmem:[#allocation2 + $0x10] sm:$0xf] %vm258, %v246
        %264 = vst.msk [vmem:[#allocation2 + $0x14] sm:$0xf] %vm258, %v247
        %265 = vst.msk [vmem:[#allocation2 + $0x18] sm:$0xf] %vm258, %v248
        %266 = vst.msk [vmem:[#allocation2 + $0x1c] sm:$0xf] %vm258, %v249
        %267 = vst.msk [vmem:[#allocation2 + $0x20] sm:$0xf] %vm258, %v250
        %268 = vst.msk [vmem:[#allocation2 + $0x24] sm:$0xf] %vm258, %v251
        %269 = vst.msk [vmem:[#allocation2 + $0x28] sm:$0xf] %vm258, %v252
        %270 = vst.msk [vmem:[#allocation2 + $0x2c] sm:$0xf] %vm258, %v253
        %271 = vst.msk [vmem:[#allocation2 + $0x30] sm:$0xf] %vm258, %v254
        %272 = vst.msk [vmem:[#allocation2 + $0x34] sm:$0xf] %vm258, %v255
        %273 = vst.msk [vmem:[#allocation2 + $0x38] sm:$0xf] %vm258, %v256
        %274 = vst.msk [vmem:[#allocation2 + $0x3c] sm:$0xf] %vm258, %v257
        %v275 = vld [vmem:[%s241] sm:$0xf]
        %v276 = vld [vmem:[%s241 + $0x4] sm:$0xf]
        %v277 = vld [vmem:[%s241 + $0x8] sm:$0x1]
        %v278 = vld [vmem:[%s241 + $0xc] sm:$0xf]
        %v279 = vld [vmem:[%s241 + $0x10] sm:$0xf]
        %v280 = vld [vmem:[%s241 + $0x14] sm:$0x1]
        %v281 = vld [vmem:[%s241 + $0x18] sm:$0xf]
        %v282 = vld [vmem:[%s241 + $0x1c] sm:$0xf]
        %v283 = vld [vmem:[%s241 + $0x20] sm:$0x1]
        %v284 = vld [vmem:[%s241 + $0x24] sm:$0xf]
        %v285 = vld [vmem:[%s241 + $0x28] sm:$0xf]
        %v286 = vld [vmem:[%s241 + $0x2c] sm:$0x1]
        %v287 = vld [vmem:[%s241 + $0x30] sm:$0xf]
        %v288 = vld [vmem:[%s241 + $0x34] sm:$0xf]
        %v289 = vld [vmem:[%s241 + $0x38] sm:$0x1]
        %v290 = vld [vmem:[%s241 + $0x3c] sm:$0xf]
        %v291 = vld [vmem:[%s241 + $0x40] sm:$0xf]
        %v292 = vld [vmem:[%s241 + $0x44] sm:$0x1]
        %v293 = vld [vmem:[%s241 + $0x48] sm:$0xf]
        %v294 = vld [vmem:[%s241 + $0x4c] sm:$0xf]
        %v295 = vld [vmem:[%s241 + $0x50] sm:$0x1]
        %v296 = vld [vmem:[%s241 + $0x54] sm:$0xf]
        %v297 = vld [vmem:[%s241 + $0x58] sm:$0xf]
        %v298 = vld [vmem:[%s241 + $0x5c] sm:$0x1]
        %vm299 = vsmask.f32 3328
        %vm300 = vsmask.f32 7440
        %vm301 = vmor %vm299, %vm300
        %v303 = vshrl.u32 %v275, 16
        %v305 = vrot.slane %v303, 4
        %v306 = vshll.u32 %v275, 16
        %v308 = vrot.slane %v306, 5
        %v309 = vor.u32 %v305, %v308
        %v310 = vrot.slane %v309, 4
        %v312 = vshll.u32 %v276, 16
        %v314 = vrot.slane %v312, 5
        %v315 = vsel %vm301, %v310, %v314
        %v316 = vshrl.u32 %v276, 16
        %v318 = vrot.slane %v316, 4
        %v319 = vor.u32 %v318, %v314
        %v320 = vrot.slane %v319, 4
        %v322 = vshll.u32 %v277, 16
        %v324 = vrot.slane %v322, 5
        %v325 = vsel %vm301, %v320, %v324
        %v327 = vshrl.u32 %v278, 16
        %v329 = vrot.slane %v327, 4
        %v330 = vshll.u32 %v278, 16
        %v332 = vrot.slane %v330, 5
        %v333 = vor.u32 %v329, %v332
        %v334 = vrot.slane %v333, 4
        %v336 = vshll.u32 %v279, 16
        %v338 = vrot.slane %v336, 5
        %v339 = vsel %vm301, %v334, %v338
        %v340 = vshrl.u32 %v279, 16
        %v342 = vrot.slane %v340, 4
        %v343 = vor.u32 %v342, %v338
        %v344 = vrot.slane %v343, 4
        %v346 = vshll.u32 %v280, 16
        %v348 = vrot.slane %v346, 5
        %v349 = vsel %vm301, %v344, %v348
        %v351 = vshrl.u32 %v281, 16
        %v353 = vrot.slane %v351, 4
        %v354 = vshll.u32 %v281, 16
        %v356 = vrot.slane %v354, 5
        %v357 = vor.u32 %v353, %v356
        %v358 = vrot.slane %v357, 4
        %v360 = vshll.u32 %v282, 16
        %v362 = vrot.slane %v360, 5
        %v363 = vsel %vm301, %v358, %v362
        %v364 = vshrl.u32 %v282, 16
        %v366 = vrot.slane %v364, 4
        %v367 = vor.u32 %v366, %v362
        %v368 = vrot.slane %v367, 4
        %v370 = vshll.u32 %v283, 16
        %v372 = vrot.slane %v370, 5
        %v373 = vsel %vm301, %v368, %v372
        %v375 = vshrl.u32 %v284, 16
        %v377 = vrot.slane %v375, 4
        %v378 = vshll.u32 %v284, 16
        %v380 = vrot.slane %v378, 5
        %v381 = vor.u32 %v377, %v380
        %v382 = vrot.slane %v381, 4
        %v384 = vshll.u32 %v285, 16
        %v386 = vrot.slane %v384, 5
        %v387 = vsel %vm301, %v382, %v386
        %v388 = vshrl.u32 %v285, 16
        %v390 = vrot.slane %v388, 4
        %v391 = vor.u32 %v390, %v386
        %v392 = vrot.slane %v391, 4
        %v394 = vshll.u32 %v286, 16
        %v396 = vrot.slane %v394, 5
        %v397 = vsel %vm301, %v392, %v396
        %v399 = vshrl.u32 %v287, 16
        %v401 = vrot.slane %v399, 4
        %v402 = vshll.u32 %v287, 16
        %v404 = vrot.slane %v402, 5
        %v405 = vor.u32 %v401, %v404
        %v406 = vrot.slane %v405, 4
        %v408 = vshll.u32 %v288, 16
        %v410 = vrot.slane %v408, 5
        %v411 = vsel %vm301, %v406, %v410
        %v412 = vshrl.u32 %v288, 16
        %v414 = vrot.slane %v412, 4
        %v415 = vor.u32 %v414, %v410
        %v416 = vrot.slane %v415, 4
        %v418 = vshll.u32 %v289, 16
        %v420 = vrot.slane %v418, 5
        %v421 = vsel %vm301, %v416, %v420
        %v423 = vshrl.u32 %v290, 16
        %v425 = vrot.slane %v423, 4
        %v426 = vshll.u32 %v290, 16
        %v428 = vrot.slane %v426, 5
        %v429 = vor.u32 %v425, %v428
        %v430 = vrot.slane %v429, 4
        %v432 = vshll.u32 %v291, 16
        %v434 = vrot.slane %v432, 5
        %v435 = vsel %vm301, %v430, %v434
        %v436 = vshrl.u32 %v291, 16
        %v438 = vrot.slane %v436, 4
        %v439 = vor.u32 %v438, %v434
        %v440 = vrot.slane %v439, 4
        %v442 = vshll.u32 %v292, 16
        %v444 = vrot.slane %v442, 5
        %v445 = vsel %vm301, %v440, %v444
        %v447 = vshrl.u32 %v293, 16
        %v449 = vrot.slane %v447, 4
        %v450 = vshll.u32 %v293, 16
        %v452 = vrot.slane %v450, 5
        %v453 = vor.u32 %v449, %v452
        %v454 = vrot.slane %v453, 4
        %v456 = vshll.u32 %v294, 16
        %v458 = vrot.slane %v456, 5
        %v459 = vsel %vm301, %v454, %v458
        %v460 = vshrl.u32 %v294, 16
        %v462 = vrot.slane %v460, 4
        %v463 = vor.u32 %v462, %v458
        %v464 = vrot.slane %v463, 4
        %v466 = vshll.u32 %v295, 16
        %v468 = vrot.slane %v466, 5
        %v469 = vsel %vm301, %v464, %v468
        %v471 = vshrl.u32 %v296, 16
        %v473 = vrot.slane %v471, 4
        %v474 = vshll.u32 %v296, 16
        %v476 = vrot.slane %v474, 5
        %v477 = vor.u32 %v473, %v476
        %v478 = vrot.slane %v477, 4
        %v480 = vshll.u32 %v297, 16
        %v482 = vrot.slane %v480, 5
        %v483 = vsel %vm301, %v478, %v482
        %v484 = vshrl.u32 %v297, 16
        %v486 = vrot.slane %v484, 4
        %v487 = vor.u32 %v486, %v482
        %v488 = vrot.slane %v487, 4
        %v490 = vshll.u32 %v298, 16
        %v492 = vrot.slane %v490, 5
        %v493 = vsel %vm301, %v488, %v492
        %494 = vrot.lane.b32.xlu0 %v315, 4
        %v495 = vpop.permute.xlu0 %494
        %496 = vrot.lane.b32.xlu0 %v325, 4
        %v497 = vpop.permute.xlu0 %496
        %498 = vrot.lane.b32.xlu0 %v339, 4
        %v499 = vpop.permute.xlu0 %498
        %500 = vrot.lane.b32.xlu0 %v349, 4
        %v501 = vpop.permute.xlu0 %500
        %502 = vrot.lane.b32.xlu0 %v363, 4
        %v503 = vpop.permute.xlu0 %502
        %504 = vrot.lane.b32.xlu0 %v373, 4
        %v505 = vpop.permute.xlu0 %504
        %506 = vrot.lane.b32.xlu0 %v387, 4
        %v507 = vpop.permute.xlu0 %506
        %508 = vrot.lane.b32.xlu0 %v397, 4
        %v509 = vpop.permute.xlu0 %508
        %510 = vrot.lane.b32.xlu0 %v411, 4
        %v511 = vpop.permute.xlu0 %510
        %512 = vrot.lane.b32.xlu0 %v421, 4
        %v513 = vpop.permute.xlu0 %512
        %514 = vrot.lane.b32.xlu0 %v435, 4
        %v515 = vpop.permute.xlu0 %514
        %516 = vrot.lane.b32.xlu0 %v445, 4
        %v517 = vpop.permute.xlu0 %516
        %518 = vrot.lane.b32.xlu0 %v459, 4
        %v519 = vpop.permute.xlu0 %518
        %520 = vrot.lane.b32.xlu0 %v469, 4
        %v521 = vpop.permute.xlu0 %520
        %522 = vrot.lane.b32.xlu0 %v483, 4
        %v523 = vpop.permute.xlu0 %522
        %524 = vrot.lane.b32.xlu0 %v493, 4
        %v525 = vpop.permute.xlu0 %524
        %vm542 = vcmask 60448
        %543 = vst.msk [vmem:[#allocation2] sm:$0xf] %vm542, %v495
        %544 = vst.msk [vmem:[#allocation2 + $0x4] sm:$0xf] %vm542, %v497
        %545 = vst.msk [vmem:[#allocation2 + $0x8] sm:$0xf] %vm542, %v499
        %546 = vst.msk [vmem:[#allocation2 + $0xc] sm:$0xf] %vm542, %v501
        %547 = vst.msk [vmem:[#allocation2 + $0x10] sm:$0xf] %vm542, %v503
        %548 = vst.msk [vmem:[#allocation2 + $0x14] sm:$0xf] %vm542, %v505
        %549 = vst.msk [vmem:[#allocation2 + $0x18] sm:$0xf] %vm542, %v507
        %550 = vst.msk [vmem:[#allocation2 + $0x1c] sm:$0xf] %vm542, %v509
        %551 = vst.msk [vmem:[#allocation2 + $0x20] sm:$0xf] %vm542, %v511
        %552 = vst.msk [vmem:[#allocation2 + $0x24] sm:$0xf] %vm542, %v513
        %553 = vst.msk [vmem:[#allocation2 + $0x28] sm:$0xf] %vm542, %v515
        %554 = vst.msk [vmem:[#allocation2 + $0x2c] sm:$0xf] %vm542, %v517
        %555 = vst.msk [vmem:[#allocation2 + $0x30] sm:$0xf] %vm542, %v519
        %556 = vst.msk [vmem:[#allocation2 + $0x34] sm:$0xf] %vm542, %v521
        %557 = vst.msk [vmem:[#allocation2 + $0x38] sm:$0xf] %vm542, %v523
        %558 = vst.msk [vmem:[#allocation2 + $0x3c] sm:$0xf] %vm542, %v525
        %v559 = vld [vmem:[%s241] sm:$0xe]
        %v560 = vld [vmem:[%s241 + $0x4] sm:$0xf]
        %v561 = vld [vmem:[%s241 + $0x8] sm:$0x1]
        %v562 = vld [vmem:[%s241 + $0xc] sm:$0xe]
        %v563 = vld [vmem:[%s241 + $0x10] sm:$0xf]
        %v564 = vld [vmem:[%s241 + $0x14] sm:$0x1]
        %v565 = vld [vmem:[%s241 + $0x18] sm:$0xe]
        %v566 = vld [vmem:[%s241 + $0x1c] sm:$0xf]
        %v567 = vld [vmem:[%s241 + $0x20] sm:$0x1]
        %v568 = vld [vmem:[%s241 + $0x24] sm:$0xe]
        %v569 = vld [vmem:[%s241 + $0x28] sm:$0xf]
        %v570 = vld [vmem:[%s241 + $0x2c] sm:$0x1]
        %v571 = vld [vmem:[%s241 + $0x30] sm:$0xe]
        %v572 = vld [vmem:[%s241 + $0x34] sm:$0xf]
        %v573 = vld [vmem:[%s241 + $0x38] sm:$0x1]
        %v574 = vld [vmem:[%s241 + $0x3c] sm:$0xe]
        %v575 = vld [vmem:[%s241 + $0x40] sm:$0xf]
        %v576 = vld [vmem:[%s241 + $0x44] sm:$0x1]
        %v577 = vld [vmem:[%s241 + $0x48] sm:$0xe]
        %v578 = vld [vmem:[%s241 + $0x4c] sm:$0xf]
        %v579 = vld [vmem:[%s241 + $0x50] sm:$0x1]
        %v580 = vld [vmem:[%s241 + $0x54] sm:$0xe]
        %v581 = vld [vmem:[%s241 + $0x58] sm:$0xf]
        %v582 = vld [vmem:[%s241 + $0x5c] sm:$0x1]
        %vm607 = vcmask 1042432
        %vm608 = vcmask 1046532
        %vm609 = vmor %vm607, %vm608
        %v610 = vrot.slane %v559, 5
        %v611 = vrot.slane %v610, 4
        %v612 = vrot.slane %v560, 5
        %v613 = vsel %vm609, %v611, %v612
        %v614 = vrot.slane %v612, 4
        %v615 = vrot.slane %v561, 5
        %v616 = vsel %vm609, %v614, %v615
        %v617 = vrot.slane %v562, 5
        %v618 = vrot.slane %v617, 4
        %v619 = vrot.slane %v563, 5
        %v620 = vsel %vm609, %v618, %v619
        %v621 = vrot.slane %v619, 4
        %v622 = vrot.slane %v564, 5
        %v623 = vsel %vm609, %v621, %v622
        %v624 = vrot.slane %v565, 5
        %v625 = vrot.slane %v624, 4
        %v626 = vrot.slane %v566, 5
        %v627 = vsel %vm609, %v625, %v626
        %v628 = vrot.slane %v626, 4
        %v629 = vrot.slane %v567, 5
        %v630 = vsel %vm609, %v628, %v629
        %v631 = vrot.slane %v568, 5
        %v632 = vrot.slane %v631, 4
        %v633 = vrot.slane %v569, 5
        %v634 = vsel %vm609, %v632, %v633
        %v635 = vrot.slane %v633, 4
        %v636 = vrot.slane %v570, 5
        %v637 = vsel %vm609, %v635, %v636
        %v638 = vrot.slane %v571, 5
        %v639 = vrot.slane %v638, 4
        %v640 = vrot.slane %v572, 5
        %v641 = vsel %vm609, %v639, %v640
        %v642 = vrot.slane %v640, 4
        %v643 = vrot.slane %v573, 5
        %v644 = vsel %vm609, %v642, %v643
        %v645 = vrot.slane %v574, 5
        %v646 = vrot.slane %v645, 4
        %v647 = vrot.slane %v575, 5
        %v648 = vsel %vm609, %v646, %v647
        %v649 = vrot.slane %v647, 4
        %v650 = vrot.slane %v576, 5
        %v651 = vsel %vm609, %v649, %v650
        %v652 = vrot.slane %v577, 5
        %v653 = vrot.slane %v652, 4
        %v654 = vrot.slane %v578, 5
        %v655 = vsel %vm609, %v653, %v654
        %v656 = vrot.slane %v654, 4
        %v657 = vrot.slane %v579, 5
        %v658 = vsel %vm609, %v656, %v657
        %v659 = vrot.slane %v580, 5
        %v660 = vrot.slane %v659, 4
        %v661 = vrot.slane %v581, 5
        %v662 = vsel %vm609, %v660, %v661
        %v663 = vrot.slane %v661, 4
        %v664 = vrot.slane %v582, 5
        %v665 = vsel %vm609, %v663, %v664
        %666 = vrot.lane.b32.xlu0 %v613, 8
        %v667 = vpop.permute.xlu0 %666
        %668 = vrot.lane.b32.xlu0 %v616, 8
        %v669 = vpop.permute.xlu0 %668
        %670 = vrot.lane.b32.xlu0 %v620, 8
        %v671 = vpop.permute.xlu0 %670
        %672 = vrot.lane.b32.xlu0 %v623, 8
        %v673 = vpop.permute.xlu0 %672
        %674 = vrot.lane.b32.xlu0 %v627, 8
        %v675 = vpop.permute.xlu0 %674
        %676 = vrot.lane.b32.xlu0 %v630, 8
        %v677 = vpop.permute.xlu0 %676
        %678 = vrot.lane.b32.xlu0 %v634, 8
        %v679 = vpop.permute.xlu0 %678
        %680 = vrot.lane.b32.xlu0 %v637, 8
        %v681 = vpop.permute.xlu0 %680
        %682 = vrot.lane.b32.xlu0 %v641, 8
        %v683 = vpop.permute.xlu0 %682
        %684 = vrot.lane.b32.xlu0 %v644, 8
        %v685 = vpop.permute.xlu0 %684
        %686 = vrot.lane.b32.xlu0 %v648, 8
        %v687 = vpop.permute.xlu0 %686
        %688 = vrot.lane.b32.xlu0 %v651, 8
        %v689 = vpop.permute.xlu0 %688
        %690 = vrot.lane.b32.xlu0 %v655, 8
        %v691 = vpop.permute.xlu0 %690
        %692 = vrot.lane.b32.xlu0 %v658, 8
        %v693 = vpop.permute.xlu0 %692
        %694 = vrot.lane.b32.xlu0 %v662, 8
        %v695 = vpop.permute.xlu0 %694
        %696 = vrot.lane.b32.xlu0 %v665, 8
        %v697 = vpop.permute.xlu0 %696
        %vm714 = vcmask 93248
        %715 = vst.msk [vmem:[#allocation2] sm:$0xf] %vm714, %v667
        %716 = vst.msk [vmem:[#allocation2 + $0x4] sm:$0xf] %vm714, %v669
        %717 = vst.msk [vmem:[#allocation2 + $0x8] sm:$0xf] %vm714, %v671
        %718 = vst.msk [vmem:[#allocation2 + $0xc] sm:$0xf] %vm714, %v673
        %719 = vst.msk [vmem:[#allocation2 + $0x10] sm:$0xf] %vm714, %v675
        %720 = vst.msk [vmem:[#allocation2 + $0x14] sm:$0xf] %vm714, %v677
        %721 = vst.msk [vmem:[#allocation2 + $0x18] sm:$0xf] %vm714, %v679
        %722 = vst.msk [vmem:[#allocation2 + $0x1c] sm:$0xf] %vm714, %v681
        %723 = vst.msk [vmem:[#allocation2 + $0x20] sm:$0xf] %vm714, %v683
        %724 = vst.msk [vmem:[#allocation2 + $0x24] sm:$0xf] %vm714, %v685
        %725 = vst.msk [vmem:[#allocation2 + $0x28] sm:$0xf] %vm714, %v687
        %726 = vst.msk [vmem:[#allocation2 + $0x2c] sm:$0xf] %vm714, %v689
        %727 = vst.msk [vmem:[#allocation2 + $0x30] sm:$0xf] %vm714, %v691
        %728 = vst.msk [vmem:[#allocation2 + $0x34] sm:$0xf] %vm714, %v693
        %729 = vst.msk [vmem:[#allocation2 + $0x38] sm:$0xf] %vm714, %v695
        %730 = vst.msk [vmem:[#allocation2 + $0x3c] sm:$0xf] %vm714, %v697
        %s731 = sadd.s32 %s238, 1
        %s732 = smul.u32 %s731, 3
        %s733 = smul.addr %s732, 4
        %s734 = scalar_lea.vmem %s236, %s733
        %v735 = vld [vmem:[%s734] sm:$0xf]
        %v736 = vld [vmem:[%s734 + $0x4] sm:$0xf]
        %v737 = vld [vmem:[%s734 + $0xc] sm:$0xf]
        %v738 = vld [vmem:[%s734 + $0x10] sm:$0xf]
        %v739 = vld [vmem:[%s734 + $0x18] sm:$0xf]
        %v740 = vld [vmem:[%s734 + $0x1c] sm:$0xf]
        %v741 = vld [vmem:[%s734 + $0x24] sm:$0xf]
        %v742 = vld [vmem:[%s734 + $0x28] sm:$0xf]
        %v743 = vld [vmem:[%s734 + $0x30] sm:$0xf]
        %v744 = vld [vmem:[%s734 + $0x34] sm:$0xf]
        %v745 = vld [vmem:[%s734 + $0x3c] sm:$0xf]
        %v746 = vld [vmem:[%s734 + $0x40] sm:$0xf]
        %v747 = vld [vmem:[%s734 + $0x48] sm:$0xf]
        %v748 = vld [vmem:[%s734 + $0x4c] sm:$0xf]
        %v749 = vld [vmem:[%s734 + $0x54] sm:$0xf]
        %v750 = vld [vmem:[%s734 + $0x58] sm:$0xf]
        %767 = vrot.lane.b32.xlu0 %v735, 12
        %v768 = vpop.permute.xlu0 %767
        %769 = vrot.lane.b32.xlu0 %v736, 12
        %v770 = vpop.permute.xlu0 %769
        %771 = vrot.lane.b32.xlu0 %v737, 12
        %v772 = vpop.permute.xlu0 %771
        %773 = vrot.lane.b32.xlu0 %v738, 12
        %v774 = vpop.permute.xlu0 %773
        %775 = vrot.lane.b32.xlu0 %v739, 12
        %v776 = vpop.permute.xlu0 %775
        %777 = vrot.lane.b32.xlu0 %v740, 12
        %v778 = vpop.permute.xlu0 %777
        %779 = vrot.lane.b32.xlu0 %v741, 12
        %v780 = vpop.permute.xlu0 %779
        %781 = vrot.lane.b32.xlu0 %v742, 12
        %v782 = vpop.permute.xlu0 %781
        %783 = vrot.lane.b32.xlu0 %v743, 12
        %v784 = vpop.permute.xlu0 %783
        %785 = vrot.lane.b32.xlu0 %v744, 12
        %v786 = vpop.permute.xlu0 %785
        %787 = vrot.lane.b32.xlu0 %v745, 12
        %v788 = vpop.permute.xlu0 %787
        %789 = vrot.lane.b32.xlu0 %v746, 12
        %v790 = vpop.permute.xlu0 %789
        %791 = vrot.lane.b32.xlu0 %v747, 12
        %v792 = vpop.permute.xlu0 %791
        %793 = vrot.lane.b32.xlu0 %v748, 12
        %v794 = vpop.permute.xlu0 %793
        %795 = vrot.lane.b32.xlu0 %v749, 12
        %v796 = vpop.permute.xlu0 %795
        %797 = vrot.lane.b32.xlu0 %v750, 12
        %v798 = vpop.permute.xlu0 %797
        %vm815 = vcmask 126048
        %816 = vst.msk [vmem:[#allocation2] sm:$0xf] %vm815, %v768
        %817 = vst.msk [vmem:[#allocation2 + $0x4] sm:$0xf] %vm815, %v770
        %818 = vst.msk [vmem:[#allocation2 + $0x8] sm:$0xf] %vm815, %v772
        %819 = vst.msk [vmem:[#allocation2 + $0xc] sm:$0xf] %vm815, %v774
        %820 = vst.msk [vmem:[#allocation2 + $0x10] sm:$0xf] %vm815, %v776
        %821 = vst.msk [vmem:[#allocation2 + $0x14] sm:$0xf] %vm815, %v778
        %822 = vst.msk [vmem:[#allocation2 + $0x18] sm:$0xf] %vm815, %v780
        %823 = vst.msk [vmem:[#allocation2 + $0x1c] sm:$0xf] %vm815, %v782
        %824 = vst.msk [vmem:[#allocation2 + $0x20] sm:$0xf] %vm815, %v784
        %825 = vst.msk [vmem:[#allocation2 + $0x24] sm:$0xf] %vm815, %v786
        %826 = vst.msk [vmem:[#allocation2 + $0x28] sm:$0xf] %vm815, %v788
        %827 = vst.msk [vmem:[#allocation2 + $0x2c] sm:$0xf] %vm815, %v790
        %828 = vst.msk [vmem:[#allocation2 + $0x30] sm:$0xf] %vm815, %v792
        %829 = vst.msk [vmem:[#allocation2 + $0x34] sm:$0xf] %vm815, %v794
        %830 = vst.msk [vmem:[#allocation2 + $0x38] sm:$0xf] %vm815, %v796
        %831 = vst.msk [vmem:[#allocation2 + $0x3c] sm:$0xf] %vm815, %v798
        %v832 = vld [vmem:[%s734] sm:$0xf]
        %v833 = vld [vmem:[%s734 + $0x4] sm:$0xf]
        %v834 = vld [vmem:[%s734 + $0x8] sm:$0x1]
        %v835 = vld [vmem:[%s734 + $0xc] sm:$0xf]
        %v836 = vld [vmem:[%s734 + $0x10] sm:$0xf]
        %v837 = vld [vmem:[%s734 + $0x14] sm:$0x1]
        %v838 = vld [vmem:[%s734 + $0x18] sm:$0xf]
        %v839 = vld [vmem:[%s734 + $0x1c] sm:$0xf]
        %v840 = vld [vmem:[%s734 + $0x20] sm:$0x1]
        %v841 = vld [vmem:[%s734 + $0x24] sm:$0xf]
        %v842 = vld [vmem:[%s734 + $0x28] sm:$0xf]
        %v843 = vld [vmem:[%s734 + $0x2c] sm:$0x1]
        %v844 = vld [vmem:[%s734 + $0x30] sm:$0xf]
        %v845 = vld [vmem:[%s734 + $0x34] sm:$0xf]
        %v846 = vld [vmem:[%s734 + $0x38] sm:$0x1]
        %v847 = vld [vmem:[%s734 + $0x3c] sm:$0xf]
        %v848 = vld [vmem:[%s734 + $0x40] sm:$0xf]
        %v849 = vld [vmem:[%s734 + $0x44] sm:$0x1]
        %v850 = vld [vmem:[%s734 + $0x48] sm:$0xf]
        %v851 = vld [vmem:[%s734 + $0x4c] sm:$0xf]
        %v852 = vld [vmem:[%s734 + $0x50] sm:$0x1]
        %v853 = vld [vmem:[%s734 + $0x54] sm:$0xf]
        %v854 = vld [vmem:[%s734 + $0x58] sm:$0xf]
        %v855 = vld [vmem:[%s734 + $0x5c] sm:$0x1]
        %v857 = vshrl.u32 %v832, 16
        %v859 = vrot.slane %v857, 4
        %v860 = vshll.u32 %v832, 16
        %v862 = vrot.slane %v860, 5
        %v863 = vor.u32 %v859, %v862
        %v864 = vrot.slane %v863, 4
        %v866 = vshll.u32 %v833, 16
        %v868 = vrot.slane %v866, 5
        %v869 = vsel %vm301, %v864, %v868
        %v870 = vshrl.u32 %v833, 16
        %v872 = vrot.slane %v870, 4
        %v873 = vor.u32 %v872, %v868
        %v874 = vrot.slane %v873, 4
        %v876 = vshll.u32 %v834, 16
        %v878 = vrot.slane %v876, 5
        %v879 = vsel %vm301, %v874, %v878
        %v881 = vshrl.u32 %v835, 16
        %v883 = vrot.slane %v881, 4
        %v884 = vshll.u32 %v835, 16
        %v886 = vrot.slane %v884, 5
        %v887 = vor.u32 %v883, %v886
        %v888 = vrot.slane %v887, 4
        %v890 = vshll.u32 %v836, 16
        %v892 = vrot.slane %v890, 5
        %v893 = vsel %vm301, %v888, %v892
        %v894 = vshrl.u32 %v836, 16
        %v896 = vrot.slane %v894, 4
        %v897 = vor.u32 %v896, %v892
        %v898 = vrot.slane %v897, 4
        %v900 = vshll.u32 %v837, 16
        %v902 = vrot.slane %v900, 5
        %v903 = vsel %vm301, %v898, %v902
        %v905 = vshrl.u32 %v838, 16
        %v907 = vrot.slane %v905, 4
        %v908 = vshll.u32 %v838, 16
        %v910 = vrot.slane %v908, 5
        %v911 = vor.u32 %v907, %v910
        %v912 = vrot.slane %v911, 4
        %v914 = vshll.u32 %v839, 16
        %v916 = vrot.slane %v914, 5
        %v917 = vsel %vm301, %v912, %v916
        %v918 = vshrl.u32 %v839, 16
        %v920 = vrot.slane %v918, 4
        %v921 = vor.u32 %v920, %v916
        %v922 = vrot.slane %v921, 4
        %v924 = vshll.u32 %v840, 16
        %v926 = vrot.slane %v924, 5
        %v927 = vsel %vm301, %v922, %v926
        %v929 = vshrl.u32 %v841, 16
        %v931 = vrot.slane %v929, 4
        %v932 = vshll.u32 %v841, 16
        %v934 = vrot.slane %v932, 5
        %v935 = vor.u32 %v931, %v934
        %v936 = vrot.slane %v935, 4
        %v938 = vshll.u32 %v842, 16
        %v940 = vrot.slane %v938, 5
        %v941 = vsel %vm301, %v936, %v940
        %v942 = vshrl.u32 %v842, 16
        %v944 = vrot.slane %v942, 4
        %v945 = vor.u32 %v944, %v940
        %v946 = vrot.slane %v945, 4
        %v948 = vshll.u32 %v843, 16
        %v950 = vrot.slane %v948, 5
        %v951 = vsel %vm301, %v946, %v950
        %v953 = vshrl.u32 %v844, 16
        %v955 = vrot.slane %v953, 4
        %v956 = vshll.u32 %v844, 16
        %v958 = vrot.slane %v956, 5
        %v959 = vor.u32 %v955, %v958
        %v960 = vrot.slane %v959, 4
        %v962 = vshll.u32 %v845, 16
        %v964 = vrot.slane %v962, 5
        %v965 = vsel %vm301, %v960, %v964
        %v966 = vshrl.u32 %v845, 16
        %v968 = vrot.slane %v966, 4
        %v969 = vor.u32 %v968, %v964
        %v970 = vrot.slane %v969, 4
        %v972 = vshll.u32 %v846, 16
        %v974 = vrot.slane %v972, 5
        %v975 = vsel %vm301, %v970, %v974
        %v977 = vshrl.u32 %v847, 16
        %v979 = vrot.slane %v977, 4
        %v980 = vshll.u32 %v847, 16
        %v982 = vrot.slane %v980, 5
        %v983 = vor.u32 %v979, %v982
        %v984 = vrot.slane %v983, 4
        %v986 = vshll.u32 %v848, 16
        %v988 = vrot.slane %v986, 5
        %v989 = vsel %vm301, %v984, %v988
        %v990 = vshrl.u32 %v848, 16
        %v992 = vrot.slane %v990, 4
        %v993 = vor.u32 %v992, %v988
        %v994 = vrot.slane %v993, 4
        %v996 = vshll.u32 %v849, 16
        %v998 = vrot.slane %v996, 5
        %v999 = vsel %vm301, %v994, %v998
        %v1001 = vshrl.u32 %v850, 16
        %v1003 = vrot.slane %v1001, 4
        %v1004 = vshll.u32 %v850, 16
        %v1006 = vrot.slane %v1004, 5
        %v1007 = vor.u32 %v1003, %v1006
        %v1008 = vrot.slane %v1007, 4
        %v1010 = vshll.u32 %v851, 16
        %v1012 = vrot.slane %v1010, 5
        %v1013 = vsel %vm301, %v1008, %v1012
        %v1014 = vshrl.u32 %v851, 16
        %v1016 = vrot.slane %v1014, 4
        %v1017 = vor.u32 %v1016, %v1012
        %v1018 = vrot.slane %v1017, 4
        %v1020 = vshll.u32 %v852, 16
        %v1022 = vrot.slane %v1020, 5
        %v1023 = vsel %vm301, %v1018, %v1022
        %v1025 = vshrl.u32 %v853, 16
        %v1027 = vrot.slane %v1025, 4
        %v1028 = vshll.u32 %v853, 16
        %v1030 = vrot.slane %v1028, 5
        %v1031 = vor.u32 %v1027, %v1030
        %v1032 = vrot.slane %v1031, 4
        %v1034 = vshll.u32 %v854, 16
        %v1036 = vrot.slane %v1034, 5
        %v1037 = vsel %vm301, %v1032, %v1036
        %v1038 = vshrl.u32 %v854, 16
        %v1040 = vrot.slane %v1038, 4
        %v1041 = vor.u32 %v1040, %v1036
        %v1042 = vrot.slane %v1041, 4
        %v1044 = vshll.u32 %v855, 16
        %v1046 = vrot.slane %v1044, 5
        %v1047 = vsel %vm301, %v1042, %v1046
        %1048 = vrot.lane.b32.xlu0 %v869, 16
        %v1049 = vpop.permute.xlu0 %1048
        %1050 = vrot.lane.b32.xlu0 %v879, 16
        %v1051 = vpop.permute.xlu0 %1050
        %1052 = vrot.lane.b32.xlu0 %v893, 16
        %v1053 = vpop.permute.xlu0 %1052
        %1054 = vrot.lane.b32.xlu0 %v903, 16
        %v1055 = vpop.permute.xlu0 %1054
        %1056 = vrot.lane.b32.xlu0 %v917, 16
        %v1057 = vpop.permute.xlu0 %1056
        %1058 = vrot.lane.b32.xlu0 %v927, 16
        %v1059 = vpop.permute.xlu0 %1058
        %1060 = vrot.lane.b32.xlu0 %v941, 16
        %v1061 = vpop.permute.xlu0 %1060
        %1062 = vrot.lane.b32.xlu0 %v951, 16
        %v1063 = vpop.permute.xlu0 %1062
        %1064 = vrot.lane.b32.xlu0 %v965, 16
        %v1065 = vpop.permute.xlu0 %1064
        %1066 = vrot.lane.b32.xlu0 %v975, 16
        %v1067 = vpop.permute.xlu0 %1066
        %1068 = vrot.lane.b32.xlu0 %v989, 16
        %v1069 = vpop.permute.xlu0 %1068
        %1070 = vrot.lane.b32.xlu0 %v999, 16
        %v1071 = vpop.permute.xlu0 %1070
        %1072 = vrot.lane.b32.xlu0 %v1013, 16
        %v1073 = vpop.permute.xlu0 %1072
        %1074 = vrot.lane.b32.xlu0 %v1023, 16
        %v1075 = vpop.permute.xlu0 %1074
        %1076 = vrot.lane.b32.xlu0 %v1037, 16
        %v1077 = vpop.permute.xlu0 %1076
        %1078 = vrot.lane.b32.xlu0 %v1047, 16
        %v1079 = vpop.permute.xlu0 %1078
        %vm1096 = vcmask 158848
        %1097 = vst.msk [vmem:[#allocation2] sm:$0xf] %vm1096, %v1049
        %1098 = vst.msk [vmem:[#allocation2 + $0x4] sm:$0xf] %vm1096, %v1051
        %1099 = vst.msk [vmem:[#allocation2 + $0x8] sm:$0xf] %vm1096, %v1053
        %1100 = vst.msk [vmem:[#allocation2 + $0xc] sm:$0xf] %vm1096, %v1055
        %1101 = vst.msk [vmem:[#allocation2 + $0x10] sm:$0xf] %vm1096, %v1057
        %1102 = vst.msk [vmem:[#allocation2 + $0x14] sm:$0xf] %vm1096, %v1059
        %1103 = vst.msk [vmem:[#allocation2 + $0x18] sm:$0xf] %vm1096, %v1061
        %1104 = vst.msk [vmem:[#allocation2 + $0x1c] sm:$0xf] %vm1096, %v1063
        %1105 = vst.msk [vmem:[#allocation2 + $0x20] sm:$0xf] %vm1096, %v1065
        %1106 = vst.msk [vmem:[#allocation2 + $0x24] sm:$0xf] %vm1096, %v1067
        %1107 = vst.msk [vmem:[#allocation2 + $0x28] sm:$0xf] %vm1096, %v1069
        %1108 = vst.msk [vmem:[#allocation2 + $0x2c] sm:$0xf] %vm1096, %v1071
        %1109 = vst.msk [vmem:[#allocation2 + $0x30] sm:$0xf] %vm1096, %v1073
        %1110 = vst.msk [vmem:[#allocation2 + $0x34] sm:$0xf] %vm1096, %v1075
        %1111 = vst.msk [vmem:[#allocation2 + $0x38] sm:$0xf] %vm1096, %v1077
        %1112 = vst.msk [vmem:[#allocation2 + $0x3c] sm:$0xf] %vm1096, %v1079
        %v1113 = vld [vmem:[%s734] sm:$0xe]
        %v1114 = vld [vmem:[%s734 + $0x4] sm:$0xf]
        %v1115 = vld [vmem:[%s734 + $0x8] sm:$0x1]
        %v1116 = vld [vmem:[%s734 + $0xc] sm:$0xe]
        %v1117 = vld [vmem:[%s734 + $0x10] sm:$0xf]
        %v1118 = vld [vmem:[%s734 + $0x14] sm:$0x1]
        %v1119 = vld [vmem:[%s734 + $0x18] sm:$0xe]
        %v1120 = vld [vmem:[%s734 + $0x1c] sm:$0xf]
        %v1121 = vld [vmem:[%s734 + $0x20] sm:$0x1]
        %v1122 = vld [vmem:[%s734 + $0x24] sm:$0xe]
        %v1123 = vld [vmem:[%s734 + $0x28] sm:$0xf]
        %v1124 = vld [vmem:[%s734 + $0x2c] sm:$0x1]
        %v1125 = vld [vmem:[%s734 + $0x30] sm:$0xe]
        %v1126 = vld [vmem:[%s734 + $0x34] sm:$0xf]
        %v1127 = vld [vmem:[%s734 + $0x38] sm:$0x1]
        %v1128 = vld [vmem:[%s734 + $0x3c] sm:$0xe]
        %v1129 = vld [vmem:[%s734 + $0x40] sm:$0xf]
        %v1130 = vld [vmem:[%s734 + $0x44] sm:$0x1]
        %v1131 = vld [vmem:[%s734 + $0x48] sm:$0xe]
        %v1132 = vld [vmem:[%s734 + $0x4c] sm:$0xf]
        %v1133 = vld [vmem:[%s734 + $0x50] sm:$0x1]
        %v1134 = vld [vmem:[%s734 + $0x54] sm:$0xe]
        %v1135 = vld [vmem:[%s734 + $0x58] sm:$0xf]
        %v1136 = vld [vmem:[%s734 + $0x5c] sm:$0x1]
        %v1161 = vrot.slane %v1113, 5
        %v1162 = vrot.slane %v1161, 4
        %v1163 = vrot.slane %v1114, 5
        %v1164 = vsel %vm609, %v1162, %v1163
        %v1165 = vrot.slane %v1163, 4
        %v1166 = vrot.slane %v1115, 5
        %v1167 = vsel %vm609, %v1165, %v1166
        %v1168 = vrot.slane %v1116, 5
        %v1169 = vrot.slane %v1168, 4
        %v1170 = vrot.slane %v1117, 5
        %v1171 = vsel %vm609, %v1169, %v1170
        %v1172 = vrot.slane %v1170, 4
        %v1173 = vrot.slane %v1118, 5
        %v1174 = vsel %vm609, %v1172, %v1173
        %v1175 = vrot.slane %v1119, 5
        %v1176 = vrot.slane %v1175, 4
        %v1177 = vrot.slane %v1120, 5
        %v1178 = vsel %vm609, %v1176, %v1177
        %v1179 = vrot.slane %v1177, 4
        %v1180 = vrot.slane %v1121, 5
        %v1181 = vsel %vm609, %v1179, %v1180
        %v1182 = vrot.slane %v1122, 5
        %v1183 = vrot.slane %v1182, 4
        %v1184 = vrot.slane %v1123, 5
        %v1185 = vsel %vm609, %v1183, %v1184
        %v1186 = vrot.slane %v1184, 4
        %v1187 = vrot.slane %v1124, 5
        %v1188 = vsel %vm609, %v1186, %v1187
        %v1189 = vrot.slane %v1125, 5
        %v1190 = vrot.slane %v1189, 4
        %v1191 = vrot.slane %v1126, 5
        %v1192 = vsel %vm609, %v1190, %v1191
        %v1193 = vrot.slane %v1191, 4
        %v1194 = vrot.slane %v1127, 5
        %v1195 = vsel %vm609, %v1193, %v1194
        %v1196 = vrot.slane %v1128, 5
        %v1197 = vrot.slane %v1196, 4
        %v1198 = vrot.slane %v1129, 5
        %v1199 = vsel %vm609, %v1197, %v1198
        %v1200 = vrot.slane %v1198, 4
        %v1201 = vrot.slane %v1130, 5
        %v1202 = vsel %vm609, %v1200, %v1201
        %v1203 = vrot.slane %v1131, 5
        %v1204 = vrot.slane %v1203, 4
        %v1205 = vrot.slane %v1132, 5
        %v1206 = vsel %vm609, %v1204, %v1205
        %v1207 = vrot.slane %v1205, 4
        %v1208 = vrot.slane %v1133, 5
        %v1209 = vsel %vm609, %v1207, %v1208
        %v1210 = vrot.slane %v1134, 5
        %v1211 = vrot.slane %v1210, 4
        %v1212 = vrot.slane %v1135, 5
        %v1213 = vsel %vm609, %v1211, %v1212
        %v1214 = vrot.slane %v1212, 4
        %v1215 = vrot.slane %v1136, 5
        %v1216 = vsel %vm609, %v1214, %v1215
        %1217 = vrot.lane.b32.xlu0 %v1164, 20
        %v1218 = vpop.permute.xlu0 %1217
        %1219 = vrot.lane.b32.xlu0 %v1167, 20
        %v1220 = vpop.permute.xlu0 %1219
        %1221 = vrot.lane.b32.xlu0 %v1171, 20
        %v1222 = vpop.permute.xlu0 %1221
        %1223 = vrot.lane.b32.xlu0 %v1174, 20
        %v1224 = vpop.permute.xlu0 %1223
        %1225 = vrot.lane.b32.xlu0 %v1178, 20
        %v1226 = vpop.permute.xlu0 %1225
        %1227 = vrot.lane.b32.xlu0 %v1181, 20
        %v1228 = vpop.permute.xlu0 %1227
        %1229 = vrot.lane.b32.xlu0 %v1185, 20
        %v1230 = vpop.permute.xlu0 %1229
        %1231 = vrot.lane.b32.xlu0 %v1188, 20
        %v1232 = vpop.permute.xlu0 %1231
        %1233 = vrot.lane.b32.xlu0 %v1192, 20
        %v1234 = vpop.permute.xlu0 %1233
        %1235 = vrot.lane.b32.xlu0 %v1195, 20
        %v1236 = vpop.permute.xlu0 %1235
        %1237 = vrot.lane.b32.xlu0 %v1199, 20
        %v1238 = vpop.permute.xlu0 %1237
        %1239 = vrot.lane.b32.xlu0 %v1202, 20
        %v1240 = vpop.permute.xlu0 %1239
        %1241 = vrot.lane.b32.xlu0 %v1206, 20
        %v1242 = vpop.permute.xlu0 %1241
        %1243 = vrot.lane.b32.xlu0 %v1209, 20
        %v1244 = vpop.permute.xlu0 %1243
        %1245 = vrot.lane.b32.xlu0 %v1213, 20
        %v1246 = vpop.permute.xlu0 %1245
        %1247 = vrot.lane.b32.xlu0 %v1216, 20
        %v1248 = vpop.permute.xlu0 %1247
        %vm1265 = vcmask 191648
        %1266 = vst.msk [vmem:[#allocation2] sm:$0xf] %vm1265, %v1218
        %1267 = vst.msk [vmem:[#allocation2 + $0x4] sm:$0xf] %vm1265, %v1220
        %1268 = vst.msk [vmem:[#allocation2 + $0x8] sm:$0xf] %vm1265, %v1222
        %1269 = vst.msk [vmem:[#allocation2 + $0xc] sm:$0xf] %vm1265, %v1224
        %1270 = vst.msk [vmem:[#allocation2 + $0x10] sm:$0xf] %vm1265, %v1226
        %1271 = vst.msk [vmem:[#allocation2 + $0x14] sm:$0xf] %vm1265, %v1228
        %1272 = vst.msk [vmem:[#allocation2 + $0x18] sm:$0xf] %vm1265, %v1230
        %1273 = vst.msk [vmem:[#allocation2 + $0x1c] sm:$0xf] %vm1265, %v1232
        %1274 = vst.msk [vmem:[#allocation2 + $0x20] sm:$0xf] %vm1265, %v1234
        %1275 = vst.msk [vmem:[#allocation2 + $0x24] sm:$0xf] %vm1265, %v1236
        %1276 = vst.msk [vmem:[#allocation2 + $0x28] sm:$0xf] %vm1265, %v1238
        %1277 = vst.msk [vmem:[#allocation2 + $0x2c] sm:$0xf] %vm1265, %v1240
        %1278 = vst.msk [vmem:[#allocation2 + $0x30] sm:$0xf] %vm1265, %v1242
        %1279 = vst.msk [vmem:[#allocation2 + $0x34] sm:$0xf] %vm1265, %v1244
        %1280 = vst.msk [vmem:[#allocation2 + $0x38] sm:$0xf] %vm1265, %v1246
        %1281 = vst.msk [vmem:[#allocation2 + $0x3c] sm:$0xf] %vm1265, %v1248
        %s1282 = sadd.s32 %s238, 2
        %s1283 = smul.u32 %s1282, 3
        %s1284 = smul.addr %s1283, 4
        %s1285 = scalar_lea.vmem %s236, %s1284
        %v1286 = vld [vmem:[%s1285] sm:$0xf]
        %v1287 = vld [vmem:[%s1285 + $0x4] sm:$0xf]
        %v1288 = vld [vmem:[%s1285 + $0xc] sm:$0xf]
        %v1289 = vld [vmem:[%s1285 + $0x10] sm:$0xf]
        %v1290 = vld [vmem:[%s1285 + $0x18] sm:$0xf]
        %v1291 = vld [vmem:[%s1285 + $0x1c] sm:$0xf]
        %v1292 = vld [vmem:[%s1285 + $0x24] sm:$0xf]
        %v1293 = vld [vmem:[%s1285 + $0x28] sm:$0xf]
        %v1294 = vld [vmem:[%s1285 + $0x30] sm:$0xf]
        %v1295 = vld [vmem:[%s1285 + $0x34] sm:$0xf]
        %v1296 = vld [vmem:[%s1285 + $0x3c] sm:$0xf]
        %v1297 = vld [vmem:[%s1285 + $0x40] sm:$0xf]
        %v1298 = vld [vmem:[%s1285 + $0x48] sm:$0xf]
        %v1299 = vld [vmem:[%s1285 + $0x4c] sm:$0xf]
        %v1300 = vld [vmem:[%s1285 + $0x54] sm:$0xf]
        %v1301 = vld [vmem:[%s1285 + $0x58] sm:$0xf]
        %1318 = vrot.lane.b32.xlu0 %v1286, 24
        %v1319 = vpop.permute.xlu0 %1318
        %1320 = vrot.lane.b32.xlu0 %v1287, 24
        %v1321 = vpop.permute.xlu0 %1320
        %1322 = vrot.lane.b32.xlu0 %v1288, 24
        %v1323 = vpop.permute.xlu0 %1322
        %1324 = vrot.lane.b32.xlu0 %v1289, 24
        %v1325 = vpop.permute.xlu0 %1324
        %1326 = vrot.lane.b32.xlu0 %v1290, 24
        %v1327 = vpop.permute.xlu0 %1326
        %1328 = vrot.lane.b32.xlu0 %v1291, 24
        %v1329 = vpop.permute.xlu0 %1328
        %1330 = vrot.lane.b32.xlu0 %v1292, 24
        %v1331 = vpop.permute.xlu0 %1330
        %1332 = vrot.lane.b32.xlu0 %v1293, 24
        %v1333 = vpop.permute.xlu0 %1332
        %1334 = vrot.lane.b32.xlu0 %v1294, 24
        %v1335 = vpop.permute.xlu0 %1334
        %1336 = vrot.lane.b32.xlu0 %v1295, 24
        %v1337 = vpop.permute.xlu0 %1336
        %1338 = vrot.lane.b32.xlu0 %v1296, 24
        %v1339 = vpop.permute.xlu0 %1338
        %1340 = vrot.lane.b32.xlu0 %v1297, 24
        %v1341 = vpop.permute.xlu0 %1340
        %1342 = vrot.lane.b32.xlu0 %v1298, 24
        %v1343 = vpop.permute.xlu0 %1342
        %1344 = vrot.lane.b32.xlu0 %v1299, 24
        %v1345 = vpop.permute.xlu0 %1344
        %1346 = vrot.lane.b32.xlu0 %v1300, 24
        %v1347 = vpop.permute.xlu0 %1346
        %1348 = vrot.lane.b32.xlu0 %v1301, 24
        %v1349 = vpop.permute.xlu0 %1348
        %vm1366 = vcmask 224448
        %1367 = vst.msk [vmem:[#allocation2] sm:$0xf] %vm1366, %v1319
        %1368 = vst.msk [vmem:[#allocation2 + $0x4] sm:$0xf] %vm1366, %v1321
        %1369 = vst.msk [vmem:[#allocation2 + $0x8] sm:$0xf] %vm1366, %v1323
        %1370 = vst.msk [vmem:[#allocation2 + $0xc] sm:$0xf] %vm1366, %v1325
        %1371 = vst.msk [vmem:[#allocation2 + $0x10] sm:$0xf] %vm1366, %v1327
        %1372 = vst.msk [vmem:[#allocation2 + $0x14] sm:$0xf] %vm1366, %v1329
        %1373 = vst.msk [vmem:[#allocation2 + $0x18] sm:$0xf] %vm1366, %v1331
        %1374 = vst.msk [vmem:[#allocation2 + $0x1c] sm:$0xf] %vm1366, %v1333
        %1375 = vst.msk [vmem:[#allocation2 + $0x20] sm:$0xf] %vm1366, %v1335
        %1376 = vst.msk [vmem:[#allocation2 + $0x24] sm:$0xf] %vm1366, %v1337
        %1377 = vst.msk [vmem:[#allocation2 + $0x28] sm:$0xf] %vm1366, %v1339
        %1378 = vst.msk [vmem:[#allocation2 + $0x2c] sm:$0xf] %vm1366, %v1341
        %1379 = vst.msk [vmem:[#allocation2 + $0x30] sm:$0xf] %vm1366, %v1343
        %1380 = vst.msk [vmem:[#allocation2 + $0x34] sm:$0xf] %vm1366, %v1345
        %1381 = vst.msk [vmem:[#allocation2 + $0x38] sm:$0xf] %vm1366, %v1347
        %1382 = vst.msk [vmem:[#allocation2 + $0x3c] sm:$0xf] %vm1366, %v1349
        %v1383 = vld [vmem:[%s1285] sm:$0xf]
        %v1384 = vld [vmem:[%s1285 + $0x4] sm:$0xf]
        %v1385 = vld [vmem:[%s1285 + $0x8] sm:$0x1]
        %v1386 = vld [vmem:[%s1285 + $0xc] sm:$0xf]
        %v1387 = vld [vmem:[%s1285 + $0x10] sm:$0xf]
        %v1388 = vld [vmem:[%s1285 + $0x14] sm:$0x1]
        %v1389 = vld [vmem:[%s1285 + $0x18] sm:$0xf]
        %v1390 = vld [vmem:[%s1285 + $0x1c] sm:$0xf]
        %v1391 = vld [vmem:[%s1285 + $0x20] sm:$0x1]
        %v1392 = vld [vmem:[%s1285 + $0x24] sm:$0xf]
        %v1393 = vld [vmem:[%s1285 + $0x28] sm:$0xf]
        %v1394 = vld [vmem:[%s1285 + $0x2c] sm:$0x1]
        %v1395 = vld [vmem:[%s1285 + $0x30] sm:$0xf]
        %v1396 = vld [vmem:[%s1285 + $0x34] sm:$0xf]
        %v1397 = vld [vmem:[%s1285 + $0x38] sm:$0x1]
        %v1398 = vld [vmem:[%s1285 + $0x3c] sm:$0xf]
        %v1399 = vld [vmem:[%s1285 + $0x40] sm:$0xf]
        %v1400 = vld [vmem:[%s1285 + $0x44] sm:$0x1]
        %v1401 = vld [vmem:[%s1285 + $0x48] sm:$0xf]
        %v1402 = vld [vmem:[%s1285 + $0x4c] sm:$0xf]
        %v1403 = vld [vmem:[%s1285 + $0x50] sm:$0x1]
        %v1404 = vld [vmem:[%s1285 + $0x54] sm:$0xf]
        %v1405 = vld [vmem:[%s1285 + $0x58] sm:$0xf]
        %v1406 = vld [vmem:[%s1285 + $0x5c] sm:$0x1]
        %v1408 = vshrl.u32 %v1383, 16
        %v1410 = vrot.slane %v1408, 4
        %v1411 = vshll.u32 %v1383, 16
        %v1413 = vrot.slane %v1411, 5
        %v1414 = vor.u32 %v1410, %v1413
        %v1415 = vrot.slane %v1414, 4
        %v1417 = vshll.u32 %v1384, 16
        %v1419 = vrot.slane %v1417, 5
        %v1420 = vsel %vm301, %v1415, %v1419
        %v1421 = vshrl.u32 %v1384, 16
        %v1423 = vrot.slane %v1421, 4
        %v1424 = vor.u32 %v1423, %v1419
        %v1425 = vrot.slane %v1424, 4
        %v1427 = vshll.u32 %v1385, 16
        %v1429 = vrot.slane %v1427, 5
        %v1430 = vsel %vm301, %v1425, %v1429
        %v1432 = vshrl.u32 %v1386, 16
        %v1434 = vrot.slane %v1432, 4
        %v1435 = vshll.u32 %v1386, 16
        %v1437 = vrot.slane %v1435, 5
        %v1438 = vor.u32 %v1434, %v1437
        %v1439 = vrot.slane %v1438, 4
        %v1441 = vshll.u32 %v1387, 16
        %v1443 = vrot.slane %v1441, 5
        %v1444 = vsel %vm301, %v1439, %v1443
        %v1445 = vshrl.u32 %v1387, 16
        %v1447 = vrot.slane %v1445, 4
        %v1448 = vor.u32 %v1447, %v1443
        %v1449 = vrot.slane %v1448, 4
        %v1451 = vshll.u32 %v1388, 16
        %v1453 = vrot.slane %v1451, 5
        %v1454 = vsel %vm301, %v1449, %v1453
        %v1456 = vshrl.u32 %v1389, 16
        %v1458 = vrot.slane %v1456, 4
        %v1459 = vshll.u32 %v1389, 16
        %v1461 = vrot.slane %v1459, 5
        %v1462 = vor.u32 %v1458, %v1461
        %v1463 = vrot.slane %v1462, 4
        %v1465 = vshll.u32 %v1390, 16
        %v1467 = vrot.slane %v1465, 5
        %v1468 = vsel %vm301, %v1463, %v1467
        %v1469 = vshrl.u32 %v1390, 16
        %v1471 = vrot.slane %v1469, 4
        %v1472 = vor.u32 %v1471, %v1467
        %v1473 = vrot.slane %v1472, 4
        %v1475 = vshll.u32 %v1391, 16
        %v1477 = vrot.slane %v1475, 5
        %v1478 = vsel %vm301, %v1473, %v1477
        %v1480 = vshrl.u32 %v1392, 16
        %v1482 = vrot.slane %v1480, 4
        %v1483 = vshll.u32 %v1392, 16
        %v1485 = vrot.slane %v1483, 5
        %v1486 = vor.u32 %v1482, %v1485
        %v1487 = vrot.slane %v1486, 4
        %v1489 = vshll.u32 %v1393, 16
        %v1491 = vrot.slane %v1489, 5
        %v1492 = vsel %vm301, %v1487, %v1491
        %v1493 = vshrl.u32 %v1393, 16
        %v1495 = vrot.slane %v1493, 4
        %v1496 = vor.u32 %v1495, %v1491
        %v1497 = vrot.slane %v1496, 4
        %v1499 = vshll.u32 %v1394, 16
        %v1501 = vrot.slane %v1499, 5
        %v1502 = vsel %vm301, %v1497, %v1501
        %v1504 = vshrl.u32 %v1395, 16
        %v1506 = vrot.slane %v1504, 4
        %v1507 = vshll.u32 %v1395, 16
        %v1509 = vrot.slane %v1507, 5
        %v1510 = vor.u32 %v1506, %v1509
        %v1511 = vrot.slane %v1510, 4
        %v1513 = vshll.u32 %v1396, 16
        %v1515 = vrot.slane %v1513, 5
        %v1516 = vsel %vm301, %v1511, %v1515
        %v1517 = vshrl.u32 %v1396, 16
        %v1519 = vrot.slane %v1517, 4
        %v1520 = vor.u32 %v1519, %v1515
        %v1521 = vrot.slane %v1520, 4
        %v1523 = vshll.u32 %v1397, 16
        %v1525 = vrot.slane %v1523, 5
        %v1526 = vsel %vm301, %v1521, %v1525
        %v1528 = vshrl.u32 %v1398, 16
        %v1530 = vrot.slane %v1528, 4
        %v1531 = vshll.u32 %v1398, 16
        %v1533 = vrot.slane %v1531, 5
        %v1534 = vor.u32 %v1530, %v1533
        %v1535 = vrot.slane %v1534, 4
        %v1537 = vshll.u32 %v1399, 16
        %v1539 = vrot.slane %v1537, 5
        %v1540 = vsel %vm301, %v1535, %v1539
        %v1541 = vshrl.u32 %v1399, 16
        %v1543 = vrot.slane %v1541, 4
        %v1544 = vor.u32 %v1543, %v1539
        %v1545 = vrot.slane %v1544, 4
        %v1547 = vshll.u32 %v1400, 16
        %v1549 = vrot.slane %v1547, 5
        %v1550 = vsel %vm301, %v1545, %v1549
        %v1552 = vshrl.u32 %v1401, 16
        %v1554 = vrot.slane %v1552, 4
        %v1555 = vshll.u32 %v1401, 16
        %v1557 = vrot.slane %v1555, 5
        %v1558 = vor.u32 %v1554, %v1557
        %v1559 = vrot.slane %v1558, 4
        %v1561 = vshll.u32 %v1402, 16
        %v1563 = vrot.slane %v1561, 5
        %v1564 = vsel %vm301, %v1559, %v1563
        %v1565 = vshrl.u32 %v1402, 16
        %v1567 = vrot.slane %v1565, 4
        %v1568 = vor.u32 %v1567, %v1563
        %v1569 = vrot.slane %v1568, 4
        %v1571 = vshll.u32 %v1403, 16
        %v1573 = vrot.slane %v1571, 5
        %v1574 = vsel %vm301, %v1569, %v1573
        %v1576 = vshrl.u32 %v1404, 16
        %v1578 = vrot.slane %v1576, 4
        %v1579 = vshll.u32 %v1404, 16
        %v1581 = vrot.slane %v1579, 5
        %v1582 = vor.u32 %v1578, %v1581
        %v1583 = vrot.slane %v1582, 4
        %v1585 = vshll.u32 %v1405, 16
        %v1587 = vrot.slane %v1585, 5
        %v1588 = vsel %vm301, %v1583, %v1587
        %v1589 = vshrl.u32 %v1405, 16
        %v1591 = vrot.slane %v1589, 4
        %v1592 = vor.u32 %v1591, %v1587
        %v1593 = vrot.slane %v1592, 4
        %v1595 = vshll.u32 %v1406, 16
        %v1597 = vrot.slane %v1595, 5
        %v1598 = vsel %vm301, %v1593, %v1597
        %1599 = vrot.lane.b32.xlu0 %v1420, 28
        %v1600 = vpop.permute.xlu0 %1599
        %1601 = vrot.lane.b32.xlu0 %v1430, 28
        %v1602 = vpop.permute.xlu0 %1601
        %1603 = vrot.lane.b32.xlu0 %v1444, 28
        %v1604 = vpop.permute.xlu0 %1603
        %1605 = vrot.lane.b32.xlu0 %v1454, 28
        %v1606 = vpop.permute.xlu0 %1605
        %1607 = vrot.lane.b32.xlu0 %v1468, 28
        %v1608 = vpop.permute.xlu0 %1607
        %1609 = vrot.lane.b32.xlu0 %v1478, 28
        %v1610 = vpop.permute.xlu0 %1609
        %1611 = vrot.lane.b32.xlu0 %v1492, 28
        %v1612 = vpop.permute.xlu0 %1611
        %1613 = vrot.lane.b32.xlu0 %v1502, 28
        %v1614 = vpop.permute.xlu0 %1613
        %1615 = vrot.lane.b32.xlu0 %v1516, 28
        %v1616 = vpop.permute.xlu0 %1615
        %1617 = vrot.lane.b32.xlu0 %v1526, 28
        %v1618 = vpop.permute.xlu0 %1617
        %1619 = vrot.lane.b32.xlu0 %v1540, 28
        %v1620 = vpop.permute.xlu0 %1619
        %1621 = vrot.lane.b32.xlu0 %v1550, 28
        %v1622 = vpop.permute.xlu0 %1621
        %1623 = vrot.lane.b32.xlu0 %v1564, 28
        %v1624 = vpop.permute.xlu0 %1623
        %1625 = vrot.lane.b32.xlu0 %v1574, 28
        %v1626 = vpop.permute.xlu0 %1625
        %1627 = vrot.lane.b32.xlu0 %v1588, 28
        %v1628 = vpop.permute.xlu0 %1627
        %1629 = vrot.lane.b32.xlu0 %v1598, 28
        %v1630 = vpop.permute.xlu0 %1629
        %vm1647 = vcmask 257248
        %1648 = vst.msk [vmem:[#allocation2] sm:$0xf] %vm1647, %v1600
        %1649 = vst.msk [vmem:[#allocation2 + $0x4] sm:$0xf] %vm1647, %v1602
        %1650 = vst.msk [vmem:[#allocation2 + $0x8] sm:$0xf] %vm1647, %v1604
        %1651 = vst.msk [vmem:[#allocation2 + $0xc] sm:$0xf] %vm1647, %v1606
        %1652 = vst.msk [vmem:[#allocation2 + $0x10] sm:$0xf] %vm1647, %v1608
        %1653 = vst.msk [vmem:[#allocation2 + $0x14] sm:$0xf] %vm1647, %v1610
        %1654 = vst.msk [vmem:[#allocation2 + $0x18] sm:$0xf] %vm1647, %v1612
        %1655 = vst.msk [vmem:[#allocation2 + $0x1c] sm:$0xf] %vm1647, %v1614
        %1656 = vst.msk [vmem:[#allocation2 + $0x20] sm:$0xf] %vm1647, %v1616
        %1657 = vst.msk [vmem:[#allocation2 + $0x24] sm:$0xf] %vm1647, %v1618
        %1658 = vst.msk [vmem:[#allocation2 + $0x28] sm:$0xf] %vm1647, %v1620
        %1659 = vst.msk [vmem:[#allocation2 + $0x2c] sm:$0xf] %vm1647, %v1622
        %1660 = vst.msk [vmem:[#allocation2 + $0x30] sm:$0xf] %vm1647, %v1624
        %1661 = vst.msk [vmem:[#allocation2 + $0x34] sm:$0xf] %vm1647, %v1626
        %1662 = vst.msk [vmem:[#allocation2 + $0x38] sm:$0xf] %vm1647, %v1628
        %1663 = vst.msk [vmem:[#allocation2 + $0x3c] sm:$0xf] %vm1647, %v1630
        %v1664 = vld [vmem:[%s1285] sm:$0xe]
        %v1665 = vld [vmem:[%s1285 + $0x4] sm:$0xf]
        %v1666 = vld [vmem:[%s1285 + $0x8] sm:$0x1]
        %v1667 = vld [vmem:[%s1285 + $0xc] sm:$0xe]
        %v1668 = vld [vmem:[%s1285 + $0x10] sm:$0xf]
        %v1669 = vld [vmem:[%s1285 + $0x14] sm:$0x1]
        %v1670 = vld [vmem:[%s1285 + $0x18] sm:$0xe]
        %v1671 = vld [vmem:[%s1285 + $0x1c] sm:$0xf]
        %v1672 = vld [vmem:[%s1285 + $0x20] sm:$0x1]
        %v1673 = vld [vmem:[%s1285 + $0x24] sm:$0xe]
        %v1674 = vld [vmem:[%s1285 + $0x28] sm:$0xf]
        %v1675 = vld [vmem:[%s1285 + $0x2c] sm:$0x1]
        %v1676 = vld [vmem:[%s1285 + $0x30] sm:$0xe]
        %v1677 = vld [vmem:[%s1285 + $0x34] sm:$0xf]
        %v1678 = vld [vmem:[%s1285 + $0x38] sm:$0x1]
        %v1679 = vld [vmem:[%s1285 + $0x3c] sm:$0xe]
        %v1680 = vld [vmem:[%s1285 + $0x40] sm:$0xf]
        %v1681 = vld [vmem:[%s1285 + $0x44] sm:$0x1]
        %v1682 = vld [vmem:[%s1285 + $0x48] sm:$0xe]
        %v1683 = vld [vmem:[%s1285 + $0x4c] sm:$0xf]
        %v1684 = vld [vmem:[%s1285 + $0x50] sm:$0x1]
        %v1685 = vld [vmem:[%s1285 + $0x54] sm:$0xe]
        %v1686 = vld [vmem:[%s1285 + $0x58] sm:$0xf]
        %v1687 = vld [vmem:[%s1285 + $0x5c] sm:$0x1]
        %v1712 = vrot.slane %v1664, 5
        %v1713 = vrot.slane %v1712, 4
        %v1714 = vrot.slane %v1665, 5
        %v1715 = vsel %vm609, %v1713, %v1714
        %v1716 = vrot.slane %v1714, 4
        %v1717 = vrot.slane %v1666, 5
        %v1718 = vsel %vm609, %v1716, %v1717
        %v1719 = vrot.slane %v1667, 5
        %v1720 = vrot.slane %v1719, 4
        %v1721 = vrot.slane %v1668, 5
        %v1722 = vsel %vm609, %v1720, %v1721
        %v1723 = vrot.slane %v1721, 4
        %v1724 = vrot.slane %v1669, 5
        %v1725 = vsel %vm609, %v1723, %v1724
        %v1726 = vrot.slane %v1670, 5
        %v1727 = vrot.slane %v1726, 4
        %v1728 = vrot.slane %v1671, 5
        %v1729 = vsel %vm609, %v1727, %v1728
        %v1730 = vrot.slane %v1728, 4
        %v1731 = vrot.slane %v1672, 5
        %v1732 = vsel %vm609, %v1730, %v1731
        %v1733 = vrot.slane %v1673, 5
        %v1734 = vrot.slane %v1733, 4
        %v1735 = vrot.slane %v1674, 5
        %v1736 = vsel %vm609, %v1734, %v1735
        %v1737 = vrot.slane %v1735, 4
        %v1738 = vrot.slane %v1675, 5
        %v1739 = vsel %vm609, %v1737, %v1738
        %v1740 = vrot.slane %v1676, 5
        %v1741 = vrot.slane %v1740, 4
        %v1742 = vrot.slane %v1677, 5
        %v1743 = vsel %vm609, %v1741, %v1742
        %v1744 = vrot.slane %v1742, 4
        %v1745 = vrot.slane %v1678, 5
        %v1746 = vsel %vm609, %v1744, %v1745
        %v1747 = vrot.slane %v1679, 5
        %v1748 = vrot.slane %v1747, 4
        %v1749 = vrot.slane %v1680, 5
        %v1750 = vsel %vm609, %v1748, %v1749
        %v1751 = vrot.slane %v1749, 4
        %v1752 = vrot.slane %v1681, 5
        %v1753 = vsel %vm609, %v1751, %v1752
        %v1754 = vrot.slane %v1682, 5
        %v1755 = vrot.slane %v1754, 4
        %v1756 = vrot.slane %v1683, 5
        %v1757 = vsel %vm609, %v1755, %v1756
        %v1758 = vrot.slane %v1756, 4
        %v1759 = vrot.slane %v1684, 5
        %v1760 = vsel %vm609, %v1758, %v1759
        %v1761 = vrot.slane %v1685, 5
        %v1762 = vrot.slane %v1761, 4
        %v1763 = vrot.slane %v1686, 5
        %v1764 = vsel %vm609, %v1762, %v1763
        %v1765 = vrot.slane %v1763, 4
        %v1766 = vrot.slane %v1687, 5
        %v1767 = vsel %vm609, %v1765, %v1766
        %1768 = vrot.lane.b32.xlu0 %v1715, 32
        %v1769 = vpop.permute.xlu0 %1768
        %1770 = vrot.lane.b32.xlu0 %v1718, 32
        %v1771 = vpop.permute.xlu0 %1770
        %1772 = vrot.lane.b32.xlu0 %v1722, 32
        %v1773 = vpop.permute.xlu0 %1772
        %1774 = vrot.lane.b32.xlu0 %v1725, 32
        %v1775 = vpop.permute.xlu0 %1774
        %1776 = vrot.lane.b32.xlu0 %v1729, 32
        %v1777 = vpop.permute.xlu0 %1776
        %1778 = vrot.lane.b32.xlu0 %v1732, 32
        %v1779 = vpop.permute.xlu0 %1778
        %1780 = vrot.lane.b32.xlu0 %v1736, 32
        %v1781 = vpop.permute.xlu0 %1780
        %1782 = vrot.lane.b32.xlu0 %v1739, 32
        %v1783 = vpop.permute.xlu0 %1782
        %1784 = vrot.lane.b32.xlu0 %v1743, 32
        %v1785 = vpop.permute.xlu0 %1784
        %1786 = vrot.lane.b32.xlu0 %v1746, 32
        %v1787 = vpop.permute.xlu0 %1786
        %1788 = vrot.lane.b32.xlu0 %v1750, 32
        %v1789 = vpop.permute.xlu0 %1788
        %1790 = vrot.lane.b32.xlu0 %v1753, 32
        %v1791 = vpop.permute.xlu0 %1790
        %1792 = vrot.lane.b32.xlu0 %v1757, 32
        %v1793 = vpop.permute.xlu0 %1792
        %1794 = vrot.lane.b32.xlu0 %v1760, 32
        %v1795 = vpop.permute.xlu0 %1794
        %1796 = vrot.lane.b32.xlu0 %v1764, 32
        %v1797 = vpop.permute.xlu0 %1796
        %1798 = vrot.lane.b32.xlu0 %v1767, 32
        %v1799 = vpop.permute.xlu0 %1798
        %vm1816 = vcmask 290048
        %1817 = vst.msk [vmem:[#allocation2] sm:$0xf] %vm1816, %v1769
        %1818 = vst.msk [vmem:[#allocation2 + $0x4] sm:$0xf] %vm1816, %v1771
        %1819 = vst.msk [vmem:[#allocation2 + $0x8] sm:$0xf] %vm1816, %v1773
        %1820 = vst.msk [vmem:[#allocation2 + $0xc] sm:$0xf] %vm1816, %v1775
        %1821 = vst.msk [vmem:[#allocation2 + $0x10] sm:$0xf] %vm1816, %v1777
        %1822 = vst.msk [vmem:[#allocation2 + $0x14] sm:$0xf] %vm1816, %v1779
        %1823 = vst.msk [vmem:[#allocation2 + $0x18] sm:$0xf] %vm1816, %v1781
        %1824 = vst.msk [vmem:[#allocation2 + $0x1c] sm:$0xf] %vm1816, %v1783
        %1825 = vst.msk [vmem:[#allocation2 + $0x20] sm:$0xf] %vm1816, %v1785
        %1826 = vst.msk [vmem:[#allocation2 + $0x24] sm:$0xf] %vm1816, %v1787
        %1827 = vst.msk [vmem:[#allocation2 + $0x28] sm:$0xf] %vm1816, %v1789
        %1828 = vst.msk [vmem:[#allocation2 + $0x2c] sm:$0xf] %vm1816, %v1791
        %1829 = vst.msk [vmem:[#allocation2 + $0x30] sm:$0xf] %vm1816, %v1793
        %1830 = vst.msk [vmem:[#allocation2 + $0x34] sm:$0xf] %vm1816, %v1795
        %1831 = vst.msk [vmem:[#allocation2 + $0x38] sm:$0xf] %vm1816, %v1797
        %1832 = vst.msk [vmem:[#allocation2 + $0x3c] sm:$0xf] %vm1816, %v1799
        %v1833 = vld [vmem:[#allocation2] sm:$0xf]
        %v1834 = vld [vmem:[#allocation2 + $0x4] sm:$0xf]
        %v1835 = vld [vmem:[#allocation2 + $0x8] sm:$0xf]
        %v1836 = vld [vmem:[#allocation2 + $0xc] sm:$0xf]
        %v1837 = vld [vmem:[#allocation2 + $0x10] sm:$0xf]
        %v1838 = vld [vmem:[#allocation2 + $0x14] sm:$0xf]
        %v1839 = vld [vmem:[#allocation2 + $0x18] sm:$0xf]
        %v1840 = vld [vmem:[#allocation2 + $0x1c] sm:$0xf]
        %v1841 = vld [vmem:[#allocation2 + $0x20] sm:$0xf]
        %v1842 = vld [vmem:[#allocation2 + $0x24] sm:$0xf]
        %v1843 = vld [vmem:[#allocation2 + $0x28] sm:$0xf]
        %v1844 = vld [vmem:[#allocation2 + $0x2c] sm:$0xf]
        %v1845 = vld [vmem:[#allocation2 + $0x30] sm:$0xf]
        %v1846 = vld [vmem:[#allocation2 + $0x34] sm:$0xf]
        %v1847 = vld [vmem:[#allocation2 + $0x38] sm:$0xf]
        %v1848 = vld [vmem:[#allocation2 + $0x3c] sm:$0xf]
        %v1849 = vld [vmem:[%s1] sm:$0xf]
        %v1850 = vld [vmem:[%s1 + $0x4] sm:$0xf]
        %v1851 = vld [vmem:[%s1 + $0x8] sm:$0xf]
        %v1852 = vld [vmem:[%s1 + $0xc] sm:$0xf]
        %v1853 = vld [vmem:[%s1 + $0x10] sm:$0x3]
        %v1870 = vunpack.c.l.b16 %v1833
        %v1871 = vunpack.c.l.b16 %v1834
        %v1872 = vunpack.c.l.b16 %v1835
        %v1873 = vunpack.c.l.b16 %v1836
        %v1874 = vunpack.c.l.b16 %v1837
        %v1875 = vunpack.c.l.b16 %v1838
        %v1876 = vunpack.c.l.b16 %v1839
        %v1877 = vunpack.c.l.b16 %v1840
        %v1878 = vunpack.c.l.b16 %v1841
        %v1879 = vunpack.c.l.b16 %v1842
        %v1880 = vunpack.c.l.b16 %v1843
        %v1881 = vunpack.c.l.b16 %v1844
        %v1882 = vunpack.c.l.b16 %v1845
        %v1883 = vunpack.c.l.b16 %v1846
        %v1884 = vunpack.c.l.b16 %v1847
        %v1885 = vunpack.c.l.b16 %v1848
        %v1886 = vpack.c.b16 %v1871, %v1870
        %v1887 = vpack.c.b16 %v1873, %v1872
        %v1888 = vpack.c.b16 %v1875, %v1874
        %v1889 = vpack.c.b16 %v1877, %v1876
        %v1890 = vpack.c.b16 %v1879, %v1878
        %v1891 = vpack.c.b16 %v1881, %v1880
        %v1892 = vpack.c.b16 %v1883, %v1882
        %v1893 = vpack.c.b16 %v1885, %v1884
        %v1899 = vunpack.c.l.b16 %v1849
        %v1900 = vunpack.c.l.b16 %v1850
        %v1901 = vunpack.c.l.b16 %v1851
        %v1902 = vunpack.c.l.b16 %v1852
        %v1903 = vunpack.c.l.b16 %v1853
        %v1904 = vpack.c.b16 %v1900, %v1899
        %v1905 = vpack.c.b16 %v1902, %v1901
        %v1906 = vpack.c.b16 %v1903, %v1903
        %vm1909 = vcmask 293888
        %v1911 = vsel %vm1909, %v1886, 0
        %v1914 = vsel %vm1909, %v1887, 0
        %v1917 = vsel %vm1909, %v1888, 0
        %v1920 = vsel %vm1909, %v1889, 0
        %v1923 = vsel %vm1909, %v1890, 0
        %v1926 = vsel %vm1909, %v1891, 0
        %v1929 = vsel %vm1909, %v1892, 0
        %v1932 = vsel %vm1909, %v1893, 0
        %vm1934 = vcmask 1041408
        %v1936 = vsel %vm1934, %v1906, 0
        %1938 = vmatprep.subr.bf16.mxu0 0
        %1939 = vmatpush1.bf16.msra.mxu0 0
        %1940 = vmatprep.subr.bf16.mxu0 0
        %1941 = vmatpush1.bf16.msra.mxu0 0
        %1942 = vmatprep.subr.bf16.mxu0 0
        %1943 = vmatpush1.bf16.msra.mxu0 0
        %1944 = vmatprep.subr.bf16.mxu0 0
        %1945 = vmatpush1.bf16.msra.mxu0 0
        %1946 = vmatprep.subr.bf16.mxu0 0
        %1947 = vmatpush1.bf16.msra.mxu0 0
        %1948 = vmatprep.subr.bf16.mxu0 0
        %1949 = vmatpush1.bf16.msra.mxu0 %v1936
        %1950 = vmatprep.subr.bf16.mxu0 0
        %1951 = vmatpush1.bf16.msra.mxu0 %v1905
        %1952 = vmatprep.subr.bf16.mxu0 0
        %1953 = vmatpush1.bf16.msra.mxu0 %v1904
        %1954 = vmatprep.subr.bf16.mxu0 0
        %1955 = vmatpush2.bf16.msra.mxu0 0
        %1956 = vmatprep.subr.bf16.mxu0 0
        %1957 = vmatpush2.bf16.msra.mxu0 0
        %1958 = vmatprep.subr.bf16.mxu0 0
        %1959 = vmatpush2.bf16.msra.mxu0 0
        %1960 = vmatprep.subr.bf16.mxu0 0
        %1961 = vmatpush2.bf16.msra.mxu0 0
        %1962 = vmatprep.subr.bf16.mxu0 0
        %1963 = vmatpush2.bf16.msra.mxu0 0
        %1964 = vmatprep.subr.bf16.mxu0 0
        %1965 = vmatpush2.bf16.msra.mxu0 0
        %1966 = vmatprep.subr.bf16.mxu0 0
        %1967 = vmatpush2.bf16.msra.mxu0 0
        %1968 = vmatprep.subr.bf16.mxu0 0
        %1969 = vmatpush2.bf16.msra.mxu0 0
        %1970 = vmatprep.mubr.bf16.mxu0 0
        %1971 = vmatmul.mubr.bf16.gmra.mxu0 %v1911
        %v1972 = vpop.f32.mrf.mxu0
        %v1973 = vadd.f32 0.0, %v1972
        %v1974 = vpop.f32.mrf.mxu0
        %v1975 = vpop.f32.mrf.mxu0
        %v1976 = vadd.f32 0.0, %v1975
        %v1977 = vpop.f32.mrf.mxu0
        %1978 = vmatprep.mubr.bf16.mxu0 0
        %1979 = vmatmul.mubr.bf16.gmra.mxu0 %v1914
        %v1980 = vpop.f32.mrf.mxu0
        %v1981 = vadd.f32 0.0, %v1980
        %v1982 = vpop.f32.mrf.mxu0
        %v1983 = vpop.f32.mrf.mxu0
        %v1984 = vadd.f32 0.0, %v1983
        %v1985 = vpop.f32.mrf.mxu0
        %1986 = vmatprep.mubr.bf16.mxu0 0
        %1987 = vmatmul.mubr.bf16.gmra.mxu0 %v1917
        %v1988 = vpop.f32.mrf.mxu0
        %v1989 = vadd.f32 0.0, %v1988
        %v1990 = vpop.f32.mrf.mxu0
        %v1991 = vpop.f32.mrf.mxu0
        %v1992 = vadd.f32 0.0, %v1991
        %v1993 = vpop.f32.mrf.mxu0
        %1994 = vmatprep.mubr.bf16.mxu0 0
        %1995 = vmatmul.mubr.bf16.gmra.mxu0 %v1920
        %v1996 = vpop.f32.mrf.mxu0
        %v1997 = vadd.f32 0.0, %v1996
        %v1998 = vpop.f32.mrf.mxu0
        %v1999 = vpop.f32.mrf.mxu0
        %v2000 = vadd.f32 0.0, %v1999
        %v2001 = vpop.f32.mrf.mxu0
        %2002 = vmatprep.mubr.bf16.mxu0 0
        %2003 = vmatmul.mubr.bf16.gmra.mxu0 %v1923
        %v2004 = vpop.f32.mrf.mxu0
        %v2005 = vadd.f32 0.0, %v2004
        %v2006 = vpop.f32.mrf.mxu0
        %v2007 = vpop.f32.mrf.mxu0
        %v2008 = vadd.f32 0.0, %v2007
        %v2009 = vpop.f32.mrf.mxu0
        %2010 = vmatprep.mubr.bf16.mxu0 0
        %2011 = vmatmul.mubr.bf16.gmra.mxu0 %v1926
        %v2012 = vpop.f32.mrf.mxu0
        %v2013 = vadd.f32 0.0, %v2012
        %v2014 = vpop.f32.mrf.mxu0
        %v2015 = vpop.f32.mrf.mxu0
        %v2016 = vadd.f32 0.0, %v2015
        %v2017 = vpop.f32.mrf.mxu0
        %2018 = vmatprep.mubr.bf16.mxu0 0
        %2019 = vmatmul.mubr.bf16.gmra.mxu0 %v1929
        %v2020 = vpop.f32.mrf.mxu0
        %v2021 = vadd.f32 0.0, %v2020
        %v2022 = vpop.f32.mrf.mxu0
        %v2023 = vpop.f32.mrf.mxu0
        %v2024 = vadd.f32 0.0, %v2023
        %v2025 = vpop.f32.mrf.mxu0
        %2026 = vmatprep.mubr.bf16.mxu0 0
        %2027 = vmatmul.mubr.bf16.gmra.mxu0 %v1932
        %v2028 = vpop.f32.mrf.mxu0
        %v2029 = vadd.f32 0.0, %v2028
        %v2030 = vpop.f32.mrf.mxu0
        %v2031 = vpop.f32.mrf.mxu0
        %v2032 = vadd.f32 0.0, %v2031
        %v2033 = vpop.f32.mrf.mxu0
        %2034 = vdwg.mxu0
        %v2035 = vld [vmem:[%s2] sm:$0x1]
        %v2037 = vlaneseq
        %v2038 = vshrl.u32 %v2037, 7
        %v2039 = vsub.s32 0, %v2038
        %v2040 = vrot.slane %v2035, %v2039
        %v2042 = vmul.f32 %v1973, %v2040
        %v2043 = vmul.f32 %v1976, %v2040
        %v2044 = vmul.f32 %v1981, %v2040
        %v2045 = vmul.f32 %v1984, %v2040
        %v2046 = vmul.f32 %v1989, %v2040
        %v2047 = vmul.f32 %v1992, %v2040
        %v2048 = vmul.f32 %v1997, %v2040
        %v2049 = vmul.f32 %v2000, %v2040
        %v2050 = vmul.f32 %v2005, %v2040
        %v2051 = vmul.f32 %v2008, %v2040
        %v2052 = vmul.f32 %v2013, %v2040
        %v2053 = vmul.f32 %v2016, %v2040
        %v2054 = vmul.f32 %v2021, %v2040
        %v2055 = vmul.f32 %v2024, %v2040
        %v2056 = vmul.f32 %v2029, %v2040
        %v2057 = vmul.f32 %v2032, %v2040
        %v2058 = vld [vmem:[%s3] sm:$0x1]
        %v2060 = vlaneseq
        %v2061 = vshrl.u32 %v2060, 7
        %v2062 = vsub.s32 0, %v2061
        %v2063 = vrot.slane %v2058, %v2062
        %v2065 = vadd.f32 %v2042, %v2063
        %v2066 = vadd.f32 %v2043, %v2063
        %v2067 = vadd.f32 %v2044, %v2063
        %v2068 = vadd.f32 %v2045, %v2063
        %v2069 = vadd.f32 %v2046, %v2063
        %v2070 = vadd.f32 %v2047, %v2063
        %v2071 = vadd.f32 %v2048, %v2063
        %v2072 = vadd.f32 %v2049, %v2063
        %v2073 = vadd.f32 %v2050, %v2063
        %v2074 = vadd.f32 %v2051, %v2063
        %v2075 = vadd.f32 %v2052, %v2063
        %v2076 = vadd.f32 %v2053, %v2063
        %v2077 = vadd.f32 %v2054, %v2063
        %v2078 = vadd.f32 %v2055, %v2063
        %v2079 = vadd.f32 %v2056, %v2063
        %v2080 = vadd.f32 %v2057, %v2063
        %v2081 = vld [vmem:[%s4] sm:$0x1]
        %v2083 = vlaneseq
        %v2084 = vshrl.u32 %v2083, 7
        %v2085 = vsub.s32 0, %v2084
        %v2086 = vrot.slane %v2081, %v2085
        %v2088 = vmul.f32 %v2065, %v2086
        %v2089 = vmul.f32 %v2066, %v2086
        %v2090 = vmul.f32 %v2067, %v2086
        %v2091 = vmul.f32 %v2068, %v2086
        %v2092 = vmul.f32 %v2069, %v2086
        %v2093 = vmul.f32 %v2070, %v2086
        %v2094 = vmul.f32 %v2071, %v2086
        %v2095 = vmul.f32 %v2072, %v2086
        %v2096 = vmul.f32 %v2073, %v2086
        %v2097 = vmul.f32 %v2074, %v2086
        %v2098 = vmul.f32 %v2075, %v2086
        %v2099 = vmul.f32 %v2076, %v2086
        %v2100 = vmul.f32 %v2077, %v2086
        %v2101 = vmul.f32 %v2078, %v2086
        %v2102 = vmul.f32 %v2079, %v2086
        %v2103 = vmul.f32 %v2080, %v2086
        %v2104 = vtanh.pop %v2088
        %v2105 = vtanh.pop %v2089
        %v2106 = vtanh.pop %v2090
        %v2107 = vtanh.pop %v2091
        %v2108 = vtanh.pop %v2092
        %v2109 = vtanh.pop %v2093
        %v2110 = vtanh.pop %v2094
        %v2111 = vtanh.pop %v2095
        %v2112 = vtanh.pop %v2096
        %v2113 = vtanh.pop %v2097
        %v2114 = vtanh.pop %v2098
        %v2115 = vtanh.pop %v2099
        %v2116 = vtanh.pop %v2100
        %v2117 = vtanh.pop %v2101
        %v2118 = vtanh.pop %v2102
        %v2119 = vtanh.pop %v2103
        %v2120 = vmul.f32 %v2104, 0.5
        %v2121 = vmul.f32 %v2105, 0.5
        %v2122 = vmul.f32 %v2106, 0.5
        %v2123 = vmul.f32 %v2107, 0.5
        %v2124 = vmul.f32 %v2108, 0.5
        %v2125 = vmul.f32 %v2109, 0.5
        %v2126 = vmul.f32 %v2110, 0.5
        %v2127 = vmul.f32 %v2111, 0.5
        %v2128 = vmul.f32 %v2112, 0.5
        %v2129 = vmul.f32 %v2113, 0.5
        %v2130 = vmul.f32 %v2114, 0.5
        %v2131 = vmul.f32 %v2115, 0.5
        %v2132 = vmul.f32 %v2116, 0.5
        %v2133 = vmul.f32 %v2117, 0.5
        %v2134 = vmul.f32 %v2118, 0.5
        %v2135 = vmul.f32 %v2119, 0.5
        %v2136 = vadd.f32 %v2120, 0.5
        %v2137 = vadd.f32 %v2121, 0.5
        %v2138 = vadd.f32 %v2122, 0.5
        %v2139 = vadd.f32 %v2123, 0.5
        %v2140 = vadd.f32 %v2124, 0.5
        %v2141 = vadd.f32 %v2125, 0.5
        %v2142 = vadd.f32 %v2126, 0.5
        %v2143 = vadd.f32 %v2127, 0.5
        %v2144 = vadd.f32 %v2128, 0.5
        %v2145 = vadd.f32 %v2129, 0.5
        %v2146 = vadd.f32 %v2130, 0.5
        %v2147 = vadd.f32 %v2131, 0.5
        %v2148 = vadd.f32 %v2132, 0.5
        %v2149 = vadd.f32 %v2133, 0.5
        %v2150 = vadd.f32 %v2134, 0.5
        %v2151 = vadd.f32 %v2135, 0.5
        %v2152 = vmul.f32 %v2065, %v2136
        %v2153 = vmul.f32 %v2066, %v2137
        %v2154 = vmul.f32 %v2067, %v2138
        %v2155 = vmul.f32 %v2068, %v2139
        %v2156 = vmul.f32 %v2069, %v2140
        %v2157 = vmul.f32 %v2070, %v2141
        %v2158 = vmul.f32 %v2071, %v2142
        %v2159 = vmul.f32 %v2072, %v2143
        %v2160 = vmul.f32 %v2073, %v2144
        %v2161 = vmul.f32 %v2074, %v2145
        %v2162 = vmul.f32 %v2075, %v2146
        %v2163 = vmul.f32 %v2076, %v2147
        %v2164 = vmul.f32 %v2077, %v2148
        %v2165 = vmul.f32 %v2078, %v2149
        %v2166 = vmul.f32 %v2079, %v2150
        %v2167 = vmul.f32 %v2080, %v2151
        %vm2168 = vcmask 64512
        %2169 = vst.msk [vmem:[#allocation3] sm:$0xff] %vm2168, %v2152
        %2170 = vst.msk [vmem:[#allocation3 + $0x8] sm:$0xff] %vm2168, %v2153
        %2171 = vst.msk [vmem:[#allocation3 + $0x10] sm:$0xff] %vm2168, %v2154
        %2172 = vst.msk [vmem:[#allocation3 + $0x18] sm:$0xff] %vm2168, %v2155
        %2173 = vst.msk [vmem:[#allocation3 + $0x20] sm:$0xff] %vm2168, %v2156
        %2174 = vst.msk [vmem:[#allocation3 + $0x28] sm:$0xff] %vm2168, %v2157
        %2175 = vst.msk [vmem:[#allocation3 + $0x30] sm:$0xff] %vm2168, %v2158
        %2176 = vst.msk [vmem:[#allocation3 + $0x38] sm:$0xff] %vm2168, %v2159
        %2177 = vst.msk [vmem:[#allocation3 + $0x40] sm:$0xff] %vm2168, %v2160
        %2178 = vst.msk [vmem:[#allocation3 + $0x48] sm:$0xff] %vm2168, %v2161
        %2179 = vst.msk [vmem:[#allocation3 + $0x50] sm:$0xff] %vm2168, %v2162
        %2180 = vst.msk [vmem:[#allocation3 + $0x58] sm:$0xff] %vm2168, %v2163
        %2181 = vst.msk [vmem:[#allocation3 + $0x60] sm:$0xff] %vm2168, %v2164
        %2182 = vst.msk [vmem:[#allocation3 + $0x68] sm:$0xff] %vm2168, %v2165
        %2183 = vst.msk [vmem:[#allocation3 + $0x70] sm:$0xff] %vm2168, %v2166
        %2184 = vst.msk [vmem:[#allocation3 + $0x78] sm:$0xff] %vm2168, %v2167
        %v2185 = vld [vmem:[#allocation3] sm:$0x1]
        %v2186 = vld [vmem:[#allocation3 + $0x10] sm:$0x1]
        %v2187 = vld [vmem:[#allocation3 + $0x20] sm:$0x1]
        %v2188 = vld [vmem:[#allocation3 + $0x30] sm:$0x1]
        %v2189 = vld [vmem:[#allocation3 + $0x40] sm:$0x1]
        %v2190 = vld [vmem:[#allocation3 + $0x50] sm:$0x1]
        %v2191 = vld [vmem:[#allocation3 + $0x60] sm:$0x1]
        %v2192 = vld [vmem:[#allocation3 + $0x70] sm:$0x1]
        %v2201 = vrot.slane %v2186, 7
        %vm2202 = vcmask 1041409
        %v2203 = vsel %vm2202, %v2201, %v2185
        %v2204 = vrot.slane %v2187, 6
        %vm2205 = vcmask 1042434
        %v2206 = vsel %vm2205, %v2204, %v2203
        %v2207 = vrot.slane %v2188, 5
        %vm2208 = vcmask 1043459
        %v2209 = vsel %vm2208, %v2207, %v2206
        %v2210 = vrot.slane %v2189, 4
        %vm2211 = vcmask 1044484
        %v2212 = vsel %vm2211, %v2210, %v2209
        %v2213 = vrot.slane %v2190, 3
        %vm2214 = vcmask 1045509
        %v2215 = vsel %vm2214, %v2213, %v2212
        %v2216 = vrot.slane %v2191, 2
        %vm2217 = vcmask 1046534
        %v2218 = vsel %vm2217, %v2216, %v2215
        %v2219 = vrot.slane %v2192, 1
        %vm2220 = vcmask 1047559
        %v2221 = vsel %vm2220, %v2219, %v2218
        %2223 = vst.msk [vmem:[%s231] sm:$0xff] %vm2168, %v2221
        %v2224 = vld [vmem:[#allocation3 + $0x1] sm:$0x1]
        %v2225 = vld [vmem:[#allocation3 + $0x11] sm:$0x1]
        %v2226 = vld [vmem:[#allocation3 + $0x21] sm:$0x1]
        %v2227 = vld [vmem:[#allocation3 + $0x31] sm:$0x1]
        %v2228 = vld [vmem:[#allocation3 + $0x41] sm:$0x1]
        %v2229 = vld [vmem:[#allocation3 + $0x51] sm:$0x1]
        %v2230 = vld [vmem:[#allocation3 + $0x61] sm:$0x1]
        %v2231 = vld [vmem:[#allocation3 + $0x71] sm:$0x1]
        %v2240 = vrot.slane %v2225, 7
        %v2241 = vsel %vm2202, %v2240, %v2224
        %v2242 = vrot.slane %v2226, 6
        %v2243 = vsel %vm2205, %v2242, %v2241
        %v2244 = vrot.slane %v2227, 5
        %v2245 = vsel %vm2208, %v2244, %v2243
        %v2246 = vrot.slane %v2228, 4
        %v2247 = vsel %vm2211, %v2246, %v2245
        %v2248 = vrot.slane %v2229, 3
        %v2249 = vsel %vm2214, %v2248, %v2247
        %v2250 = vrot.slane %v2230, 2
        %v2251 = vsel %vm2217, %v2250, %v2249
        %v2252 = vrot.slane %v2231, 1
        %v2253 = vsel %vm2220, %v2252, %v2251
        %2254 = vrot.lane.b32.xlu0 %v2253, 8
        %v2255 = vpop.permute.xlu0 %2254
        %vm2257 = vcmask 130112
        %2258 = vst.msk [vmem:[%s231] sm:$0xff] %vm2257, %v2255
        %v2259 = vld [vmem:[#allocation3 + $0x2] sm:$0x1]
        %v2260 = vld [vmem:[#allocation3 + $0x12] sm:$0x1]
        %v2261 = vld [vmem:[#allocation3 + $0x22] sm:$0x1]
        %v2262 = vld [vmem:[#allocation3 + $0x32] sm:$0x1]
        %v2263 = vld [vmem:[#allocation3 + $0x42] sm:$0x1]
        %v2264 = vld [vmem:[#allocation3 + $0x52] sm:$0x1]
        %v2265 = vld [vmem:[#allocation3 + $0x62] sm:$0x1]
        %v2266 = vld [vmem:[#allocation3 + $0x72] sm:$0x1]
        %v2275 = vrot.slane %v2260, 7
        %v2276 = vsel %vm2202, %v2275, %v2259
        %v2277 = vrot.slane %v2261, 6
        %v2278 = vsel %vm2205, %v2277, %v2276
        %v2279 = vrot.slane %v2262, 5
        %v2280 = vsel %vm2208, %v2279, %v2278
        %v2281 = vrot.slane %v2263, 4
        %v2282 = vsel %vm2211, %v2281, %v2280
        %v2283 = vrot.slane %v2264, 3
        %v2284 = vsel %vm2214, %v2283, %v2282
        %v2285 = vrot.slane %v2265, 2
        %v2286 = vsel %vm2217, %v2285, %v2284
        %v2287 = vrot.slane %v2266, 1
        %v2288 = vsel %vm2220, %v2287, %v2286
        %2289 = vrot.lane.b32.xlu0 %v2288, 16
        %v2290 = vpop.permute.xlu0 %2289
        %vm2292 = vcmask 195712
        %2293 = vst.msk [vmem:[%s231] sm:$0xff] %vm2292, %v2290
        %v2294 = vld [vmem:[#allocation3 + $0x3] sm:$0x1]
        %v2295 = vld [vmem:[#allocation3 + $0x13] sm:$0x1]
        %v2296 = vld [vmem:[#allocation3 + $0x23] sm:$0x1]
        %v2297 = vld [vmem:[#allocation3 + $0x33] sm:$0x1]
        %v2298 = vld [vmem:[#allocation3 + $0x43] sm:$0x1]
        %v2299 = vld [vmem:[#allocation3 + $0x53] sm:$0x1]
        %v2300 = vld [vmem:[#allocation3 + $0x63] sm:$0x1]
        %v2301 = vld [vmem:[#allocation3 + $0x73] sm:$0x1]
        %v2310 = vrot.slane %v2295, 7
        %v2311 = vsel %vm2202, %v2310, %v2294
        %v2312 = vrot.slane %v2296, 6
        %v2313 = vsel %vm2205, %v2312, %v2311
        %v2314 = vrot.slane %v2297, 5
        %v2315 = vsel %vm2208, %v2314, %v2313
        %v2316 = vrot.slane %v2298, 4
        %v2317 = vsel %vm2211, %v2316, %v2315
        %v2318 = vrot.slane %v2299, 3
        %v2319 = vsel %vm2214, %v2318, %v2317
        %v2320 = vrot.slane %v2300, 2
        %v2321 = vsel %vm2217, %v2320, %v2319
        %v2322 = vrot.slane %v2301, 1
        %v2323 = vsel %vm2220, %v2322, %v2321
        %2324 = vrot.lane.b32.xlu0 %v2323, 24
        %v2325 = vpop.permute.xlu0 %2324
        %vm2327 = vcmask 261312
        %2328 = vst.msk [vmem:[%s231] sm:$0xff] %vm2327, %v2325
        %v2329 = vld [vmem:[#allocation3 + $0x4] sm:$0x1]
        %v2330 = vld [vmem:[#allocation3 + $0x14] sm:$0x1]
        %v2331 = vld [vmem:[#allocation3 + $0x24] sm:$0x1]
        %v2332 = vld [vmem:[#allocation3 + $0x34] sm:$0x1]
        %v2333 = vld [vmem:[#allocation3 + $0x44] sm:$0x1]
        %v2334 = vld [vmem:[#allocation3 + $0x54] sm:$0x1]
        %v2335 = vld [vmem:[#allocation3 + $0x64] sm:$0x1]
        %v2336 = vld [vmem:[#allocation3 + $0x74] sm:$0x1]
        %v2345 = vrot.slane %v2330, 7
        %v2346 = vsel %vm2202, %v2345, %v2329
        %v2347 = vrot.slane %v2331, 6
        %v2348 = vsel %vm2205, %v2347, %v2346
        %v2349 = vrot.slane %v2332, 5
        %v2350 = vsel %vm2208, %v2349, %v2348
        %v2351 = vrot.slane %v2333, 4
        %v2352 = vsel %vm2211, %v2351, %v2350
        %v2353 = vrot.slane %v2334, 3
        %v2354 = vsel %vm2214, %v2353, %v2352
        %v2355 = vrot.slane %v2335, 2
        %v2356 = vsel %vm2217, %v2355, %v2354
        %v2357 = vrot.slane %v2336, 1
        %v2358 = vsel %vm2220, %v2357, %v2356
        %2359 = vrot.lane.b32.xlu0 %v2358, 32
        %v2360 = vpop.permute.xlu0 %2359
        %vm2362 = vcmask 326912
        %2363 = vst.msk [vmem:[%s231] sm:$0xff] %vm2362, %v2360
        %v2364 = vld [vmem:[#allocation3 + $0x5] sm:$0x1]
        %v2365 = vld [vmem:[#allocation3 + $0x15] sm:$0x1]
        %v2366 = vld [vmem:[#allocation3 + $0x25] sm:$0x1]
        %v2367 = vld [vmem:[#allocation3 + $0x35] sm:$0x1]
        %v2368 = vld [vmem:[#allocation3 + $0x45] sm:$0x1]
        %v2369 = vld [vmem:[#allocation3 + $0x55] sm:$0x1]
        %v2370 = vld [vmem:[#allocation3 + $0x65] sm:$0x1]
        %v2371 = vld [vmem:[#allocation3 + $0x75] sm:$0x1]
        %v2380 = vrot.slane %v2365, 7
        %v2381 = vsel %vm2202, %v2380, %v2364
        %v2382 = vrot.slane %v2366, 6
        %v2383 = vsel %vm2205, %v2382, %v2381
        %v2384 = vrot.slane %v2367, 5
        %v2385 = vsel %vm2208, %v2384, %v2383
        %v2386 = vrot.slane %v2368, 4
        %v2387 = vsel %vm2211, %v2386, %v2385
        %v2388 = vrot.slane %v2369, 3
        %v2389 = vsel %vm2214, %v2388, %v2387
        %v2390 = vrot.slane %v2370, 2
        %v2391 = vsel %vm2217, %v2390, %v2389
        %v2392 = vrot.slane %v2371, 1
        %v2393 = vsel %vm2220, %v2392, %v2391
        %2394 = vrot.lane.b32.xlu0 %v2393, 40
        %v2395 = vpop.permute.xlu0 %2394
        %vm2397 = vcmask 392512
        %2398 = vst.msk [vmem:[%s231] sm:$0xff] %vm2397, %v2395
        %v2399 = vld [vmem:[#allocation3 + $0x6] sm:$0x1]
        %v2400 = vld [vmem:[#allocation3 + $0x16] sm:$0x1]
        %v2401 = vld [vmem:[#allocation3 + $0x26] sm:$0x1]
        %v2402 = vld [vmem:[#allocation3 + $0x36] sm:$0x1]
        %v2403 = vld [vmem:[#allocation3 + $0x46] sm:$0x1]
        %v2404 = vld [vmem:[#allocation3 + $0x56] sm:$0x1]
        %v2405 = vld [vmem:[#allocation3 + $0x66] sm:$0x1]
        %v2406 = vld [vmem:[#allocation3 + $0x76] sm:$0x1]
        %v2415 = vrot.slane %v2400, 7
        %v2416 = vsel %vm2202, %v2415, %v2399
        %v2417 = vrot.slane %v2401, 6
        %v2418 = vsel %vm2205, %v2417, %v2416
        %v2419 = vrot.slane %v2402, 5
        %v2420 = vsel %vm2208, %v2419, %v2418
        %v2421 = vrot.slane %v2403, 4
        %v2422 = vsel %vm2211, %v2421, %v2420
        %v2423 = vrot.slane %v2404, 3
        %v2424 = vsel %vm2214, %v2423, %v2422
        %v2425 = vrot.slane %v2405, 2
        %v2426 = vsel %vm2217, %v2425, %v2424
        %v2427 = vrot.slane %v2406, 1
        %v2428 = vsel %vm2220, %v2427, %v2426
        %2429 = vrot.lane.b32.xlu0 %v2428, 48
        %v2430 = vpop.permute.xlu0 %2429
        %vm2432 = vcmask 458112
        %2433 = vst.msk [vmem:[%s231] sm:$0xff] %vm2432, %v2430
        %v2434 = vld [vmem:[#allocation3 + $0x7] sm:$0x1]
        %v2435 = vld [vmem:[#allocation3 + $0x17] sm:$0x1]
        %v2436 = vld [vmem:[#allocation3 + $0x27] sm:$0x1]
        %v2437 = vld [vmem:[#allocation3 + $0x37] sm:$0x1]
        %v2438 = vld [vmem:[#allocation3 + $0x47] sm:$0x1]
        %v2439 = vld [vmem:[#allocation3 + $0x57] sm:$0x1]
        %v2440 = vld [vmem:[#allocation3 + $0x67] sm:$0x1]
        %v2441 = vld [vmem:[#allocation3 + $0x77] sm:$0x1]
        %v2450 = vrot.slane %v2435, 7
        %v2451 = vsel %vm2202, %v2450, %v2434
        %v2452 = vrot.slane %v2436, 6
        %v2453 = vsel %vm2205, %v2452, %v2451
        %v2454 = vrot.slane %v2437, 5
        %v2455 = vsel %vm2208, %v2454, %v2453
        %v2456 = vrot.slane %v2438, 4
        %v2457 = vsel %vm2211, %v2456, %v2455
        %v2458 = vrot.slane %v2439, 3
        %v2459 = vsel %vm2214, %v2458, %v2457
        %v2460 = vrot.slane %v2440, 2
        %v2461 = vsel %vm2217, %v2460, %v2459
        %v2462 = vrot.slane %v2441, 1
        %v2463 = vsel %vm2220, %v2462, %v2461
        %2464 = vrot.lane.b32.xlu0 %v2463, 56
        %v2465 = vpop.permute.xlu0 %2464
        %vm2467 = vcmask 523712
        %2468 = vst.msk [vmem:[%s231] sm:$0xff] %vm2467, %v2465
        %v2469 = vld [vmem:[#allocation3 + $0x8] sm:$0x1]
        %v2470 = vld [vmem:[#allocation3 + $0x18] sm:$0x1]
        %v2471 = vld [vmem:[#allocation3 + $0x28] sm:$0x1]
        %v2472 = vld [vmem:[#allocation3 + $0x38] sm:$0x1]
        %v2473 = vld [vmem:[#allocation3 + $0x48] sm:$0x1]
        %v2474 = vld [vmem:[#allocation3 + $0x58] sm:$0x1]
        %v2475 = vld [vmem:[#allocation3 + $0x68] sm:$0x1]
        %v2476 = vld [vmem:[#allocation3 + $0x78] sm:$0x1]
        %v2485 = vrot.slane %v2470, 7
        %v2486 = vsel %vm2202, %v2485, %v2469
        %v2487 = vrot.slane %v2471, 6
        %v2488 = vsel %vm2205, %v2487, %v2486
        %v2489 = vrot.slane %v2472, 5
        %v2490 = vsel %vm2208, %v2489, %v2488
        %v2491 = vrot.slane %v2473, 4
        %v2492 = vsel %vm2211, %v2491, %v2490
        %v2493 = vrot.slane %v2474, 3
        %v2494 = vsel %vm2214, %v2493, %v2492
        %v2495 = vrot.slane %v2475, 2
        %v2496 = vsel %vm2217, %v2495, %v2494
        %v2497 = vrot.slane %v2476, 1
        %v2498 = vsel %vm2220, %v2497, %v2496
        %2499 = vrot.lane.b32.xlu0 %v2498, 64
        %v2500 = vpop.permute.xlu0 %2499
        %vm2502 = vcmask 589312
        %2503 = vst.msk [vmem:[%s231] sm:$0xff] %vm2502, %v2500
        %v2504 = vld [vmem:[#allocation3 + $0x9] sm:$0x1]
        %v2505 = vld [vmem:[#allocation3 + $0x19] sm:$0x1]
        %v2506 = vld [vmem:[#allocation3 + $0x29] sm:$0x1]
        %v2507 = vld [vmem:[#allocation3 + $0x39] sm:$0x1]
        %v2508 = vld [vmem:[#allocation3 + $0x49] sm:$0x1]
        %v2509 = vld [vmem:[#allocation3 + $0x59] sm:$0x1]
        %v2510 = vld [vmem:[#allocation3 + $0x69] sm:$0x1]
        %v2511 = vld [vmem:[#allocation3 + $0x79] sm:$0x1]
        %v2520 = vrot.slane %v2505, 7
        %v2521 = vsel %vm2202, %v2520, %v2504
        %v2522 = vrot.slane %v2506, 6
        %v2523 = vsel %vm2205, %v2522, %v2521
        %v2524 = vrot.slane %v2507, 5
        %v2525 = vsel %vm2208, %v2524, %v2523
        %v2526 = vrot.slane %v2508, 4
        %v2527 = vsel %vm2211, %v2526, %v2525
        %v2528 = vrot.slane %v2509, 3
        %v2529 = vsel %vm2214, %v2528, %v2527
        %v2530 = vrot.slane %v2510, 2
        %v2531 = vsel %vm2217, %v2530, %v2529
        %v2532 = vrot.slane %v2511, 1
        %v2533 = vsel %vm2220, %v2532, %v2531
        %2534 = vrot.lane.b32.xlu0 %v2533, 72
        %v2535 = vpop.permute.xlu0 %2534
        %vm2537 = vcmask 654912
        %2538 = vst.msk [vmem:[%s231] sm:$0xff] %vm2537, %v2535
        %v2539 = vld [vmem:[#allocation3 + $0xa] sm:$0x1]
        %v2540 = vld [vmem:[#allocation3 + $0x1a] sm:$0x1]
        %v2541 = vld [vmem:[#allocation3 + $0x2a] sm:$0x1]
        %v2542 = vld [vmem:[#allocation3 + $0x3a] sm:$0x1]
        %v2543 = vld [vmem:[#allocation3 + $0x4a] sm:$0x1]
        %v2544 = vld [vmem:[#allocation3 + $0x5a] sm:$0x1]
        %v2545 = vld [vmem:[#allocation3 + $0x6a] sm:$0x1]
        %v2546 = vld [vmem:[#allocation3 + $0x7a] sm:$0x1]
        %v2555 = vrot.slane %v2540, 7
        %v2556 = vsel %vm2202, %v2555, %v2539
        %v2557 = vrot.slane %v2541, 6
        %v2558 = vsel %vm2205, %v2557, %v2556
        %v2559 = vrot.slane %v2542, 5
        %v2560 = vsel %vm2208, %v2559, %v2558
        %v2561 = vrot.slane %v2543, 4
        %v2562 = vsel %vm2211, %v2561, %v2560
        %v2563 = vrot.slane %v2544, 3
        %v2564 = vsel %vm2214, %v2563, %v2562
        %v2565 = vrot.slane %v2545, 2
        %v2566 = vsel %vm2217, %v2565, %v2564
        %v2567 = vrot.slane %v2546, 1
        %v2568 = vsel %vm2220, %v2567, %v2566
        %2569 = vrot.lane.b32.xlu0 %v2568, 80
        %v2570 = vpop.permute.xlu0 %2569
        %vm2572 = vcmask 720512
        %2573 = vst.msk [vmem:[%s231] sm:$0xff] %vm2572, %v2570
        %v2574 = vld [vmem:[#allocation3 + $0xb] sm:$0x1]
        %v2575 = vld [vmem:[#allocation3 + $0x1b] sm:$0x1]
        %v2576 = vld [vmem:[#allocation3 + $0x2b] sm:$0x1]
        %v2577 = vld [vmem:[#allocation3 + $0x3b] sm:$0x1]
        %v2578 = vld [vmem:[#allocation3 + $0x4b] sm:$0x1]
        %v2579 = vld [vmem:[#allocation3 + $0x5b] sm:$0x1]
        %v2580 = vld [vmem:[#allocation3 + $0x6b] sm:$0x1]
        %v2581 = vld [vmem:[#allocation3 + $0x7b] sm:$0x1]
        %v2590 = vrot.slane %v2575, 7
        %v2591 = vsel %vm2202, %v2590, %v2574
        %v2592 = vrot.slane %v2576, 6
        %v2593 = vsel %vm2205, %v2592, %v2591
        %v2594 = vrot.slane %v2577, 5
        %v2595 = vsel %vm2208, %v2594, %v2593
        %v2596 = vrot.slane %v2578, 4
        %v2597 = vsel %vm2211, %v2596, %v2595
        %v2598 = vrot.slane %v2579, 3
        %v2599 = vsel %vm2214, %v2598, %v2597
        %v2600 = vrot.slane %v2580, 2
        %v2601 = vsel %vm2217, %v2600, %v2599
        %v2602 = vrot.slane %v2581, 1
        %v2603 = vsel %vm2220, %v2602, %v2601
        %2604 = vrot.lane.b32.xlu0 %v2603, 88
        %v2605 = vpop.permute.xlu0 %2604
        %vm2607 = vcmask 786112
        %2608 = vst.msk [vmem:[%s231] sm:$0xff] %vm2607, %v2605
        %v2609 = vld [vmem:[#allocation3 + $0xc] sm:$0x1]
        %v2610 = vld [vmem:[#allocation3 + $0x1c] sm:$0x1]
        %v2611 = vld [vmem:[#allocation3 + $0x2c] sm:$0x1]
        %v2612 = vld [vmem:[#allocation3 + $0x3c] sm:$0x1]
        %v2613 = vld [vmem:[#allocation3 + $0x4c] sm:$0x1]
        %v2614 = vld [vmem:[#allocation3 + $0x5c] sm:$0x1]
        %v2615 = vld [vmem:[#allocation3 + $0x6c] sm:$0x1]
        %v2616 = vld [vmem:[#allocation3 + $0x7c] sm:$0x1]
        %v2625 = vrot.slane %v2610, 7
        %v2626 = vsel %vm2202, %v2625, %v2609
        %v2627 = vrot.slane %v2611, 6
        %v2628 = vsel %vm2205, %v2627, %v2626
        %v2629 = vrot.slane %v2612, 5
        %v2630 = vsel %vm2208, %v2629, %v2628
        %v2631 = vrot.slane %v2613, 4
        %v2632 = vsel %vm2211, %v2631, %v2630
        %v2633 = vrot.slane %v2614, 3
        %v2634 = vsel %vm2214, %v2633, %v2632
        %v2635 = vrot.slane %v2615, 2
        %v2636 = vsel %vm2217, %v2635, %v2634
        %v2637 = vrot.slane %v2616, 1
        %v2638 = vsel %vm2220, %v2637, %v2636
        %2639 = vrot.lane.b32.xlu0 %v2638, 96
        %v2640 = vpop.permute.xlu0 %2639
        %vm2642 = vcmask 851712
        %2643 = vst.msk [vmem:[%s231] sm:$0xff] %vm2642, %v2640
        %v2644 = vld [vmem:[#allocation3 + $0xd] sm:$0x1]
        %v2645 = vld [vmem:[#allocation3 + $0x1d] sm:$0x1]
        %v2646 = vld [vmem:[#allocation3 + $0x2d] sm:$0x1]
        %v2647 = vld [vmem:[#allocation3 + $0x3d] sm:$0x1]
        %v2648 = vld [vmem:[#allocation3 + $0x4d] sm:$0x1]
        %v2649 = vld [vmem:[#allocation3 + $0x5d] sm:$0x1]
        %v2650 = vld [vmem:[#allocation3 + $0x6d] sm:$0x1]
        %v2651 = vld [vmem:[#allocation3 + $0x7d] sm:$0x1]
        %v2660 = vrot.slane %v2645, 7
        %v2661 = vsel %vm2202, %v2660, %v2644
        %v2662 = vrot.slane %v2646, 6
        %v2663 = vsel %vm2205, %v2662, %v2661
        %v2664 = vrot.slane %v2647, 5
        %v2665 = vsel %vm2208, %v2664, %v2663
        %v2666 = vrot.slane %v2648, 4
        %v2667 = vsel %vm2211, %v2666, %v2665
        %v2668 = vrot.slane %v2649, 3
        %v2669 = vsel %vm2214, %v2668, %v2667
        %v2670 = vrot.slane %v2650, 2
        %v2671 = vsel %vm2217, %v2670, %v2669
        %v2672 = vrot.slane %v2651, 1
        %v2673 = vsel %vm2220, %v2672, %v2671
        %2674 = vrot.lane.b32.xlu0 %v2673, 104
        %v2675 = vpop.permute.xlu0 %2674
        %vm2677 = vcmask 917312
        %2678 = vst.msk [vmem:[%s231] sm:$0xff] %vm2677, %v2675
        %v2679 = vld [vmem:[#allocation3 + $0xe] sm:$0x1]
        %v2680 = vld [vmem:[#allocation3 + $0x1e] sm:$0x1]
        %v2681 = vld [vmem:[#allocation3 + $0x2e] sm:$0x1]
        %v2682 = vld [vmem:[#allocation3 + $0x3e] sm:$0x1]
        %v2683 = vld [vmem:[#allocation3 + $0x4e] sm:$0x1]
        %v2684 = vld [vmem:[#allocation3 + $0x5e] sm:$0x1]
        %v2685 = vld [vmem:[#allocation3 + $0x6e] sm:$0x1]
        %v2686 = vld [vmem:[#allocation3 + $0x7e] sm:$0x1]
        %v2695 = vrot.slane %v2680, 7
        %v2696 = vsel %vm2202, %v2695, %v2679
        %v2697 = vrot.slane %v2681, 6
        %v2698 = vsel %vm2205, %v2697, %v2696
        %v2699 = vrot.slane %v2682, 5
        %v2700 = vsel %vm2208, %v2699, %v2698
        %v2701 = vrot.slane %v2683, 4
        %v2702 = vsel %vm2211, %v2701, %v2700
        %v2703 = vrot.slane %v2684, 3
        %v2704 = vsel %vm2214, %v2703, %v2702
        %v2705 = vrot.slane %v2685, 2
        %v2706 = vsel %vm2217, %v2705, %v2704
        %v2707 = vrot.slane %v2686, 1
        %v2708 = vsel %vm2220, %v2707, %v2706
        %2709 = vrot.lane.b32.xlu0 %v2708, 112
        %v2710 = vpop.permute.xlu0 %2709
        %vm2712 = vcmask 982912
        %2713 = vst.msk [vmem:[%s231] sm:$0xff] %vm2712, %v2710
        %v2714 = vld [vmem:[#allocation3 + $0xf] sm:$0x1]
        %v2715 = vld [vmem:[#allocation3 + $0x1f] sm:$0x1]
        %v2716 = vld [vmem:[#allocation3 + $0x2f] sm:$0x1]
        %v2717 = vld [vmem:[#allocation3 + $0x3f] sm:$0x1]
        %v2718 = vld [vmem:[#allocation3 + $0x4f] sm:$0x1]
        %v2719 = vld [vmem:[#allocation3 + $0x5f] sm:$0x1]
        %v2720 = vld [vmem:[#allocation3 + $0x6f] sm:$0x1]
        %v2721 = vld [vmem:[#allocation3 + $0x7f] sm:$0x1]
        %v2730 = vrot.slane %v2715, 7
        %v2731 = vsel %vm2202, %v2730, %v2714
        %v2732 = vrot.slane %v2716, 6
        %v2733 = vsel %vm2205, %v2732, %v2731
        %v2734 = vrot.slane %v2717, 5
        %v2735 = vsel %vm2208, %v2734, %v2733
        %v2736 = vrot.slane %v2718, 4
        %v2737 = vsel %vm2211, %v2736, %v2735
        %v2738 = vrot.slane %v2719, 3
        %v2739 = vsel %vm2214, %v2738, %v2737
        %v2740 = vrot.slane %v2720, 2
        %v2741 = vsel %vm2217, %v2740, %v2739
        %v2742 = vrot.slane %v2721, 1
        %v2743 = vsel %vm2220, %v2742, %v2741
        %2744 = vrot.lane.b32.xlu0 %v2743, 120
        %v2745 = vpop.permute.xlu0 %2744
        %vm2747 = vcmask 1048512
        %2748 = vst.msk [vmem:[%s231] sm:$0xff] %vm2747, %v2745
        %s2749 = sand.u32 %s151, 1
        %s2750 = scalar_lea.sflag [#allocation5], %s2749
        %s2751 = sand.u32 %s151, 1
        %s2752 = smul.addr %s2751, 8
        %s2753 = scalar_lea.vmem [#allocation4], %s2752
        // Predicated region
        $region41: #{tpu_custom_call.1} parent=39 // pred_check
          %p2754 = pneg %p161
        $region42: #{tpu_custom_call.1} parent=39 // pred_check_branch
          %2756 = sbr.rel (%p2754) target = $region44
        $region43: #{tpu_custom_call.1} parent=39 // pred_region
          %s2758 = ssub.s32 128, 128
          %2759 = vsyncadd %s2750, %s2758
          %s2760 = smul.addr %s23, 2
          %s2761 = sadd.s32 %s24, %s2760
          %s2762 = smul.addr %s2761, 128
          %s2763 = scalar_lea.hbm %s5, %s2762
          %s2765 = sshll.u32 %s2753, 4
          %s2766 = int_to_ptr.vmem [resolvable:$true] %s2765
          %2768 = dma.vmem_to_hbm [thread:$0]  %s2766, 128, %s2763, %s2750
        $region44: #{tpu_custom_call.1} parent=39 // pred_fallthru
          _
      $region40: #{tpu_custom_call.1} parent=5 // pred_fallthru
        _
      %p2769 = scmp.le.s32.totalorder 2, %s14
      // Predicated region
      $region45: #{tpu_custom_call.1} parent=5 // pred_check
        %p2770 = pneg %p2769
      $region46: #{tpu_custom_call.1} parent=5 // pred_check_branch
        %2772 = sbr.rel (%p2770) target = $region48
      $region47: #{tpu_custom_call.1} parent=5 // pred_region
        %s2773 = ssub.s32 %s14, 2
        // Predicated region
        $region49: #{tpu_custom_call.1} parent=47 // pred_check
          %p2774 = pneg %p167
        $region50: #{tpu_custom_call.1} parent=47 // pred_check_branch
          %2776 = sbr.rel (%p2774) target = $region52
        $region51: #{tpu_custom_call.1} parent=47 // pred_region
          %s2777 = sand.u32 %s152, 1
          %s2778 = scalar_lea.sflag [#allocation5], %s2777
          %s2779 = sand.u32 %s152, 1
          %s2780 = smul.addr %s2779, 8
          %s2781 = scalar_lea.vmem [#allocation4], %s2780
          %2782 = dma.done %s2778, 128
        $region52: #{tpu_custom_call.1} parent=47 // pred_fallthru
          _
      $region48: #{tpu_custom_call.1} parent=5 // pred_fallthru
        _
    $region6: #{tpu_custom_call.1} parent=1 // loop_footer
      %s18 = sadd.s32 1, %s14
    $region7: #{tpu_custom_call.1} parent=1 // loop_footer_branch
      %13 = sbr.rel target = $region3
    $region8: #{tpu_custom_call.1} parent=1 // loop_exit
      _
    %2783 = vsyncpa [#allocation5], 1
    %s2784 = scalar_lea.sflag [#allocation5], 1
    %2785 = vsyncpa %s2784, 1

</llo_original>
